<compile_context>
chip_gen: v5e
topology: v5e:2x2
jax: 0.10.0
libtpu: 0.0.40
codegen_flags: <defaults>
</compile_context>

<pallas_src>
import functools

import jax
import jax.numpy as jnp
from jax.experimental import pallas as pl
from jax.experimental.pallas import tpu as pltpu


def _patchify_kernel(x_ref, o_ref, *, patch_size, channels, w_patches,
                     rows_per_band, batch_block):
    """x_ref: (bb, C, rb*P, W) input band; o_ref: (bb, rb, Wp, D) output slab.

    One whole-band rearrangement per channel (the static channel loop is tiny,
    C = 3-4).  When the per-channel feature width P*P is a multiple of 128 the
    channel slab is stored directly into its lane-tile-aligned slice of D
    (unmasked full-width stores); otherwise the channels are concatenated once
    and written with a single D-wide lane-dense store.
    """
    P = patch_size
    Wp = w_patches
    rb = rows_per_band
    bb = batch_block
    PP = P * P

    per_channel = []
    for c in range(channels):
        t = x_ref[:, c, :, :]                    # (bb, rb*P, W) whole-band load
        t = t.reshape(bb, rb, P, Wp, P)          # (b, r, i, w, j)
        t = jnp.transpose(t, (0, 1, 3, 2, 4))    # (b, r, w, i, j)   (XLU)
        t = t.reshape(bb, rb, Wp, PP)            # feature = i*P + j
        if PP % 128 == 0:
            # Static, lane-tile-aligned slice -> unmasked full-width stores,
            # no (Wp, D) temporary, lower vreg pressure.
            o_ref[:, :, :, c * PP:(c + 1) * PP] = t.astype(o_ref.dtype)
        else:
            per_channel.append(t)
    if PP % 128 != 0:
        # Small-patch fallback (P*P < 128): one lane-dense store of the whole
        # D-wide slab instead of masked sub-128-lane partial stores.
        o_ref[...] = jnp.concatenate(per_channel, axis=-1).astype(o_ref.dtype)


def _choose_blocking(B, C, H, W, P, Hp, Wp, D, itemsize, budget_bytes):
    """Pick (batch_block bb, rows_per_band rb).

    Each grid step should move a multi-MiB block (amortizing the ~0.35 us
    per-step overhead) while the double-buffered working set (~2x the per-step
    in+out block bytes, including lane/sublane padding) stays comfortably
    inside every generation's VMEM (v7x has only 64 MiB physical).  Prefers
    >= 2 total grid steps so v7x's two TensorCores both get work.
    """
    sublane = {4: 8, 2: 16, 1: 32}.get(itemsize, 8)
    lane = 128

    def _pad(v, m):
        return -(-v // m) * m

    def block_bytes(bb, rb):
        # Include VMEM layout padding of the two minor dims in the budget.
        in_b = bb * C * _pad(rb * P, sublane) * _pad(W, lane) * itemsize
        out_b = bb * rb * _pad(Wp, sublane) * _pad(D, lane) * itemsize
        return in_b + out_b

    # Rows-per-band: largest divisor of Hp whose input block is sublane
    # aligned (rb*P % sublane == 0, or rb == Hp -> block == full dim).
    rb_candidates = [r for r in range(1, Hp + 1)
                     if Hp % r == 0 and ((r * P) % sublane == 0 or r == Hp)]
    in_budget = [r for r in rb_candidates if block_bytes(1, r) <= budget_bytes]
    rb = max(in_budget) if in_budget else min(rb_candidates)

    # Batch blocking: largest divisor of B that still fits the budget,
    # preferring configurations with >= 2 total grid steps (v7x megacore).
    bb_candidates = [b for b in range(1, B + 1)
                     if B % b == 0 and block_bytes(b, rb) <= budget_bytes] or [1]
    two_step = [b for b in bb_candidates if (B // b) * (Hp // rb) >= 2]
    bb = max(two_step) if two_step else max(bb_candidates)

    # If everything collapsed into a single step (e.g. B == 1 and the whole
    # image fits the budget), split the band axis so a megacore chip still
    # has >= 2 steps to shard.
    if (B // bb) * (Hp // rb) < 2:
        smaller = [r for r in rb_candidates
                   if r < rb and block_bytes(bb, r) <= budget_bytes]
        if smaller:
            rb = max(smaller)

    return bb, rb, block_bytes(bb, rb)


def image_preprocessor(x, patch_size, *, block_budget_bytes=12 * 1024 * 1024):
    """Pallas equivalent of ImagePreprocessor.forward(x) for NCHW `x`."""
    B, C, H, W = x.shape
    P = patch_size
    assert H % P == 0 and W % P == 0, "H and W must be divisible by patch_size"
    Hp, Wp = H // P, W // P
    N = Hp * Wp
    D = C * P * P

    itemsize = jnp.dtype(x.dtype).itemsize
    bb, rb, blk_bytes = _choose_blocking(B, C, H, W, P, Hp, Wp, D, itemsize,
                                         block_budget_bytes)

    kernel = functools.partial(
        _patchify_kernel,
        patch_size=P,
        channels=C,
        w_patches=Wp,
        rows_per_band=rb,
        batch_block=bb,
    )

    # Pure data movement: advertise its true cost (one HBM read + one write).
    cost = pl.CostEstimate(
        flops=0, transcendentals=0, bytes_accessed=2 * B * C * H * W * itemsize)

    # Double-buffered working set ~= 2x per-step block bytes; raise the scoped
    # VMEM limit above the small defaults (16 MiB v5e / 32 MiB v6e+v7x) but
    # stay well under v7x's 64 MiB physical VMEM.
    vmem_limit = int(min(max(32 << 20, 2 * blk_bytes + (4 << 20)), 48 << 20))

    out = pl.pallas_call(
        kernel,
        out_shape=jax.ShapeDtypeStruct((B, Hp, Wp, D), x.dtype),
        grid=(B // bb, Hp // rb),
        in_specs=[
            # (bb, C, rb*P, W) band: minor dim is the full W, second-minor
            # rb*P is a sublane multiple (or the full H) -> aligned dense DMA.
            # When rb == Hp the per-image read is one contiguous C*H*W run.
            pl.BlockSpec((bb, C, rb * P, W), lambda b, i: (b, 0, i, 0)),
        ],
        # (bb, rb, Wp, D) slab of the (B, Hp, Wp, D) view: last two block dims
        # equal the full array dims -> lane-dense stores, contiguous writeback.
        out_specs=pl.BlockSpec((bb, rb, Wp, D), lambda b, i: (b, i, 0, 0)),
        compiler_params=pltpu.CompilerParams(
            dimension_semantics=("parallel", "parallel"),
            vmem_limit_bytes=vmem_limit),
        cost_estimate=cost,
    )(x)

    # Free reshape of the contiguous (B, Hp, Wp, D) result to (B, N, D).
    # TODO(synk): highest-value follow-up is fusing this patchify into the
    # downstream patch-embedding matmul so (B, N, D) never round-trips HBM.
    return out.reshape(B, N, D)


def _reference(x, patch_size):
    # Pure-JAX reference of the PyTorch unfold/permute/view sequence.
    B, C, H, W = x.shape
    Hp, Wp = H // patch_size, W // patch_size
    x_r = x.reshape(B, C, Hp, patch_size, Wp, patch_size)
    x_r = jnp.transpose(x_r, (0, 2, 4, 1, 3, 5))  # (B, Hp, Wp, C, P, P)
    return x_r.reshape(B, Hp * Wp, C * patch_size * patch_size)


if __name__ == "__main__":
    key = jax.random.PRNGKey(0)

    # Config 1: P*P = 64 < 128 -> concat + single full-width store path.
    B, C, H, W, P = 2, 4, 16, 32, 8
    x = jax.random.normal(key, (B, C, H, W), dtype=jnp.float32)
    out = jax.block_until_ready(image_preprocessor(x, P))
    ref = _reference(x, P)
    assert out.shape == (B, (H // P) * (W // P), C * P * P), out.shape
    assert jnp.allclose(out, ref), "Pallas mismatch vs reference (P=8 concat path)"

    # Config 2: P*P = 256 -> lane-tile-aligned per-channel store path.
    B2, C2, H2, W2, P2 = 2, 4, 32, 32, 16
    x2 = jax.random.normal(jax.random.PRNGKey(1), (B2, C2, H2, W2),
                           dtype=jnp.float32)
    out2 = jax.block_until_ready(image_preprocessor(x2, P2))
    ref2 = _reference(x2, P2)
    assert out2.shape == (B2, (H2 // P2) * (W2 // P2), C2 * P2 * P2), out2.shape
    assert jnp.allclose(out2, ref2), "Pallas mismatch vs reference (P=16 aligned path)"

    # Config 3: tiny block budget to force the banded (rb < Hp) multi-step path.
    B3, C3, H3, W3, P3 = 1, 3, 32, 32, 8
    x3 = jax.random.normal(jax.random.PRNGKey(2), (B3, C3, H3, W3),
                           dtype=jnp.float32)
    out3 = jax.block_until_ready(
        image_preprocessor(x3, P3, block_budget_bytes=8 * 1024))
    ref3 = _reference(x3, P3)
    assert jnp.allclose(out3, ref3), "Pallas mismatch vs reference (banded path)"

    print("KERNEL_OK")
</pallas_src>

<mosaic_0001>
module attributes {stable_mosaic.version = 11 : i64} {
  func.func @_patchify_kernel(%arg0: i32, %arg1: i32, %arg2: memref<1x4x16x32xf32, #tpu.memory_space<vmem>>, %arg3: memref<1x2x4x256xf32, #tpu.memory_space<vmem>>) attributes {dimension_semantics = [#tpu.dimension_semantics<parallel>, #tpu.dimension_semantics<parallel>], iteration_bounds = array<i64: 2, 1>, scalar_prefetch = 0 : i64, scratch_operands = 0 : i64, tpu.core_type = #tpu.core_type<tc>, window_params = [{transform_indices = @transform_0, window_bounds = array<i64: 1, 4, 16, 32>}, {transform_indices = @transform_1, window_bounds = array<i64: 1, 2, 4, 256>}]} {
    %c0 = arith.constant 0 : index
    %c0_0 = arith.constant 0 : index
    %c0_1 = arith.constant 0 : index
    %c0_2 = arith.constant 0 : index
    %0 = vector.load %arg2[%c0, %c0_0, %c0_1, %c0_2] : memref<1x4x16x32xf32, #tpu.memory_space<vmem>>, vector<1x1x16x32xf32>
    %1 = vector.shape_cast %0 : vector<1x1x16x32xf32> to vector<1x16x32xf32>
    %2 = vector.shape_cast %1 : vector<1x16x32xf32> to vector<1x2x8x4x8xf32>
    %3 = tpu.transpose %2, [0, 1, 3, 2, 4] : vector<1x2x8x4x8xf32> -> vector<1x2x4x8x8xf32>
    %4 = vector.shape_cast %3 : vector<1x2x4x8x8xf32> to vector<1x2x4x64xf32>
    %c0_3 = arith.constant 0 : index
    %c1 = arith.constant 1 : index
    %c0_4 = arith.constant 0 : index
    %c0_5 = arith.constant 0 : index
    %5 = vector.load %arg2[%c0_3, %c1, %c0_4, %c0_5] : memref<1x4x16x32xf32, #tpu.memory_space<vmem>>, vector<1x1x16x32xf32>
    %6 = vector.shape_cast %5 : vector<1x1x16x32xf32> to vector<1x16x32xf32>
    %7 = vector.shape_cast %6 : vector<1x16x32xf32> to vector<1x2x8x4x8xf32>
    %8 = tpu.transpose %7, [0, 1, 3, 2, 4] : vector<1x2x8x4x8xf32> -> vector<1x2x4x8x8xf32>
    %9 = vector.shape_cast %8 : vector<1x2x4x8x8xf32> to vector<1x2x4x64xf32>
    %c0_6 = arith.constant 0 : index
    %c2 = arith.constant 2 : index
    %c0_7 = arith.constant 0 : index
    %c0_8 = arith.constant 0 : index
    %10 = vector.load %arg2[%c0_6, %c2, %c0_7, %c0_8] : memref<1x4x16x32xf32, #tpu.memory_space<vmem>>, vector<1x1x16x32xf32>
    %11 = vector.shape_cast %10 : vector<1x1x16x32xf32> to vector<1x16x32xf32>
    %12 = vector.shape_cast %11 : vector<1x16x32xf32> to vector<1x2x8x4x8xf32>
    %13 = tpu.transpose %12, [0, 1, 3, 2, 4] : vector<1x2x8x4x8xf32> -> vector<1x2x4x8x8xf32>
    %14 = vector.shape_cast %13 : vector<1x2x4x8x8xf32> to vector<1x2x4x64xf32>
    %c0_9 = arith.constant 0 : index
    %c3 = arith.constant 3 : index
    %c0_10 = arith.constant 0 : index
    %c0_11 = arith.constant 0 : index
    %15 = vector.load %arg2[%c0_9, %c3, %c0_10, %c0_11] : memref<1x4x16x32xf32, #tpu.memory_space<vmem>>, vector<1x1x16x32xf32>
    %16 = vector.shape_cast %15 : vector<1x1x16x32xf32> to vector<1x16x32xf32>
    %17 = vector.shape_cast %16 : vector<1x16x32xf32> to vector<1x2x8x4x8xf32>
    %18 = tpu.transpose %17, [0, 1, 3, 2, 4] : vector<1x2x8x4x8xf32> -> vector<1x2x4x8x8xf32>
    %19 = vector.shape_cast %18 : vector<1x2x4x8x8xf32> to vector<1x2x4x64xf32>
    %20 = tpu.concatenate %4, %9, %14, %19 in 3 : vector<1x2x4x64xf32>, vector<1x2x4x64xf32>, vector<1x2x4x64xf32>, vector<1x2x4x64xf32> -> vector<1x2x4x256xf32>
    %c0_12 = arith.constant 0 : index
    %c0_13 = arith.constant 0 : index
    %c0_14 = arith.constant 0 : index
    %c0_15 = arith.constant 0 : index
    %21 = vector.load %arg3[%c0_12, %c0_13, %c0_14, %c0_15] : memref<1x2x4x256xf32, #tpu.memory_space<vmem>>, vector<1x2x4x256xf32>
    tpu.vector_store %arg3[%c0_12, %c0_13, %c0_14, %c0_15], %20 {strides = array<i32>} : memref<1x2x4x256xf32, #tpu.memory_space<vmem>>, vector<1x2x4x256xf32>,
    return
  }
  func.func @transform_0(%arg0: i32, %arg1: i32) -> (i32, i32, i32, i32) {
    %c0_i32 = arith.constant 0 : i32
    %c0_i32_0 = arith.constant 0 : i32
    %c0_i32_1 = arith.constant 0 : i32
    return %arg0, %c0_i32, %arg1, %c0_i32_0 : i32, i32, i32, i32
  }
  func.func @transform_1(%arg0: i32, %arg1: i32) -> (i32, i32, i32, i32) {
    %c0_i32 = arith.constant 0 : i32
    %c0_i32_0 = arith.constant 0 : i32
    %c0_i32_1 = arith.constant 0 : i32
    return %arg0, %arg1, %c0_i32, %c0_i32_0 : i32, i32, i32, i32
  }
}

</mosaic_0001>

<llo_original>
// kernel: tpu_custom_call.1
$region0: #{tpu_custom_call.1}
  #allocation0 [shape = 'u32[]', space=smem, size = 0x4, offset = 0x4, fixed_abs, tag = 'smem constant byte address 0x4 - core index']
  #allocation1 [shape = 'u32[72,128]{1,0:T(1,128)}', space=vmem, size = 0x9000, scoped, tag = 'internal scratch']
  %s0 = inlined_call_operand.hbm [shape: f32[2,4,16,32], index: 0, kind: input, shape index: {}]
  %s1 = inlined_call_operand.hbm [shape: f32[2,2,4,256], index: 1, kind: output, shape index: {}]
  %s2 = sld [smem:[#allocation0]]
  $region41: #{tpu_custom_call.1} parent=0
    _
  %s4 = ssub.s32 1, %s2
  %s5 = scalar_select 0, %s4, %s2
  $region1: #{tpu_custom_call.1} parent=0
    #allocation2 [shape = 'u8[65536]{0}', space=vmem, size = 0x10000, scoped, tag = 'input window, operand 0']
    #allocation3 [shape = 's32[2]{0}', space=sflag, size = 0x8, scoped, tag = 'scoped memory for tpu_custom_call.1']
    #allocation4 [shape = 's32[2]{0}', space=sflag, size = 0x8, scoped, tag = 'scoped memory for tpu_custom_call.1']
    #allocation5 [shape = 'u8[16384]{0}', space=vmem, size = 0x4000, scoped, tag = 'output window, operand 0']
    %6 = vsyncpa [#allocation3], 0
    %s7 = scalar_lea.sflag [#allocation3], 1
    %8 = vsyncpa %s7, 0
    %9 = vsyncpa [#allocation4], 0
    %s10 = scalar_lea.sflag [#allocation4], 1
    %11 = vsyncpa %s10, 0
    loop: start=0, step=1, limit=4
    $region2: #{tpu_custom_call.1} parent=1 // loop_pre_header
      _
    $region3: #{tpu_custom_call.1} parent=1 // loop_header
      %s13 = sphi 0, %s17
      %p14 = scmp.ge.s32.totalorder %s13, 4
      %s20 = sphi 0, %s32
      %s21 = sphi 0, %s28
      %s22 = sphi 0, %s20
      %s23 = sphi 0, %s21
      %s24 = sphi 0, %s22
      %s25 = sphi 0, %s23
      %s37 = sphi 0, %s39
      %s40 = sphi 0, %s37
      %s41 = sphi 0, %s40
      %s57 = sphi 0, %s41
      %s65 = sphi 0, %s67
      %s68 = sphi 0, %s65
      %s69 = sphi 0, %s68
      %s85 = sphi 0, %s69
    $region4: #{tpu_custom_call.1} parent=1 // loop_header_branch
      %16 = sbr.rel (%p14) target = $region8
    $region5: #{tpu_custom_call.1} parent=1 // loop_body
      %s18 = ssub.s32 %s13, 1
      %s19 = ssub.s32 %s13, 2
      %s26 = sadd.s32 1, %s21
      %p27 = scmp.ge.s32.totalorder %s26, 1
      %s28 = scalar_select %p27, 0, %s26
      %s29 = sadd.s32 1, %s20
      %s30 = scalar_select %p27, %s29, %s20
      %p31 = scmp.ge.s32.totalorder %s30, 2
      %s32 = scalar_select %p31, 0, %s30
      %s33 = ssub.s32 %s20, %s32
      %s34 = ssub.s32 %s21, %s28
      %s35 = sor.u32 %s33, %s34
      %p36 = scmp.eq.s32.totalorder %s35, 0
      %s38 = sadd.s32 %s37, 1
      %s39 = scalar_select %p36, %s37, %s38
      %p42 = pneg %p36
      %p43 = scmp.eq.s32.totalorder %s13, 1
      %p44 = por %p42, %p43
      %p45 = scmp.ne.s32.totalorder %s37, %s40
      %p46 = scmp.eq.s32.totalorder %s13, 0
      %p47 = por %p45, %p46
      %p48 = scmp.ne.s32.totalorder %s37, %s40
      %p49 = scmp.eq.s32.totalorder %s18, 1
      %p50 = por %p48, %p49
      %p51 = scmp.ne.s32.totalorder %s40, %s41
      %p52 = scmp.eq.s32.totalorder %s18, 0
      %p53 = por %p51, %p52
      %p54 = scmp.ne.s32.totalorder %s40, %s41
      %p55 = scmp.eq.s32.totalorder %s19, 1
      %p56 = por %p54, %p55
      %p58 = scmp.ne.s32.totalorder %s41, %s57
      %p59 = scmp.eq.s32.totalorder %s19, 0
      %p60 = por %p58, %p59
      %s61 = ssub.s32 %s20, %s32
      %s62 = ssub.s32 %s21, %s28
      %s63 = sor.u32 %s61, %s62
      %p64 = scmp.eq.s32.totalorder %s63, 0
      %s66 = sadd.s32 %s65, 1
      %s67 = scalar_select %p64, %s65, %s66
      %p70 = pneg %p64
      %p71 = scmp.eq.s32.totalorder %s13, 1
      %p72 = por %p70, %p71
      %p73 = scmp.ne.s32.totalorder %s65, %s68
      %p74 = scmp.eq.s32.totalorder %s13, 0
      %p75 = por %p73, %p74
      %p76 = scmp.ne.s32.totalorder %s65, %s68
      %p77 = scmp.eq.s32.totalorder %s18, 1
      %p78 = por %p76, %p77
      %p79 = scmp.ne.s32.totalorder %s68, %s69
      %p80 = scmp.eq.s32.totalorder %s18, 0
      %p81 = por %p79, %p80
      %p82 = scmp.ne.s32.totalorder %s68, %s69
      %p83 = scmp.eq.s32.totalorder %s19, 1
      %p84 = por %p82, %p83
      %p86 = scmp.ne.s32.totalorder %s69, %s85
      %p87 = scmp.eq.s32.totalorder %s19, 0
      %p88 = por %p86, %p87
      %p89 = scmp.le.s32.totalorder 1, %s13
      %p90 = scmp.lt.s32.totalorder %s13, 3
      %p91 = pnand %p89, %p90
      %p92 = pneg %p91
      // Predicated region
      $region9: #{tpu_custom_call.1} parent=5 // pred_check
        _
      $region10: #{tpu_custom_call.1} parent=5 // pred_check_branch
        %94 = sbr.rel (%p91) target = $region12
      $region11: #{tpu_custom_call.1} parent=5 // pred_region
        %s95 = ssub.s32 %s13, 1
      $region12: #{tpu_custom_call.1} parent=5 // pred_fallthru
        _
      %p96 = scmp.lt.s32.totalorder %s13, 2
      // Predicated region
      $region13: #{tpu_custom_call.1} parent=5 // pred_check
        %p97 = pneg %p96
      $region14: #{tpu_custom_call.1} parent=5 // pred_check_branch
        %99 = sbr.rel (%p97) target = $region16
      $region15: #{tpu_custom_call.1} parent=5 // pred_region
        // Predicated region
        $region17: #{tpu_custom_call.1} parent=15 // pred_check
          %p100 = pneg %p47
        $region18: #{tpu_custom_call.1} parent=15 // pred_check_branch
          %102 = sbr.rel (%p100) target = $region20
        $region19: #{tpu_custom_call.1} parent=15 // pred_region
          %s103 = sand.u32 %s37, 1
          %s104 = scalar_lea.sflag [#allocation3], %s103
          %s105 = sand.u32 %s37, 1
          %s106 = smul.addr %s105, 64
          %s107 = scalar_lea.vmem [#allocation2], %s106
          %s108 = smul.u32 2, %s21
          %110 = vsyncadd %s104, 0
          %s111 = smul.addr %s20, 8
          %s112 = sadd.s32 %s108, %s111
          %s113 = smul.addr %s112, 8
          %s114 = scalar_lea.hbm %s0, %s113
          %s115 = sshll.u32 %s114, 4
          %s116 = int_to_ptr.hbm [resolvable:$true] %s115
          %s117 = sshll.u32 %s107, 4
          %s118 = int_to_ptr.vmem [resolvable:$true] %s117
          %123 = dma.hbm_to_vmem [thread:$0]  %s116, 1024, %s118, %s104, 128, 128, 8
        $region20: #{tpu_custom_call.1} parent=15 // pred_fallthru
          _
      $region16: #{tpu_custom_call.1} parent=5 // pred_fallthru
        _
      %p124 = scmp.le.s32.totalorder 1, %s13
      %p125 = scmp.lt.s32.totalorder %s13, 3
      %p126 = pnand %p124, %p125
      %p127 = pneg %p126
      // Predicated region
      $region21: #{tpu_custom_call.1} parent=5 // pred_check
        _
      $region22: #{tpu_custom_call.1} parent=5 // pred_check_branch
        %129 = sbr.rel (%p126) target = $region24
      $region23: #{tpu_custom_call.1} parent=5 // pred_region
        %s130 = ssub.s32 %s13, 1
        %s131 = sand.u32 %s40, 1
        %s132 = scalar_lea.sflag [#allocation3], %s131
        %s133 = sand.u32 %s40, 1
        %s134 = smul.addr %s133, 64
        %s135 = scalar_lea.vmem [#allocation2], %s134
        // Predicated region
        $region25: #{tpu_custom_call.1} parent=23 // pred_check
          %p136 = pneg %p53
        $region26: #{tpu_custom_call.1} parent=23 // pred_check_branch
          %138 = sbr.rel (%p136) target = $region28
        $region27: #{tpu_custom_call.1} parent=23 // pred_region
          %140 = dma.done %s132, 1024
        $region28: #{tpu_custom_call.1} parent=23 // pred_fallthru
          _
        %s141 = sand.u32 %s40, 1
        %s142 = scalar_lea.sflag [#allocation3], %s141
        %s143 = sand.u32 %s40, 1
        %s144 = smul.addr %s143, 64
        %s145 = scalar_lea.vmem [#allocation2], %s144
        %p146 = pneg %p53
        %p147 = pneg %p50
        %p148 = pneg %p81
        %p149 = pneg %p78
        %s150 = sand.u32 %s68, 1
        %s151 = scalar_lea.sflag [#allocation4], %s150
        %s152 = sand.u32 %s68, 1
        %s153 = smul.addr %s152, 16
        %s154 = scalar_lea.vmem [#allocation5], %s153
        %s155 = smul.u32 2, %s23
        %s156 = smul.u32 2, %s23
        %v157 = vld [vmem:[%s135] sm:$0xff]
        %v158 = vld [vmem:[%s135 + $0x8] sm:$0xff]
        %161 = vrot.lane.b32.xlu0 %v157, 120
        %v162 = vpop.permute.xlu0 %161
        %163 = vrot.lane.b32.xlu0 %v158, 120
        %v164 = vpop.permute.xlu0 %163
        %167 = vrot.lane.b32.xlu0 %v157, 112
        %v168 = vpop.permute.xlu0 %167
        %169 = vrot.lane.b32.xlu0 %v158, 112
        %v170 = vpop.permute.xlu0 %169
        %173 = vrot.lane.b32.xlu0 %v157, 104
        %v174 = vpop.permute.xlu0 %173
        %175 = vrot.lane.b32.xlu0 %v158, 104
        %v176 = vpop.permute.xlu0 %175
        %v179 = vrot.slane %v168, 4
        %vm180 = vcmask 1047556
        %v181 = vsel %vm180, %v179, %v157
        %v182 = vrot.slane %v157, 4
        %v183 = vsel %vm180, %v168, %v182
        %v185 = vunpack.c.l.s4 1983009808
        %v186 = vunpack.c.0.s8 %v185
        %v187 = vperm.slane %v181, %v186
        %v189 = vunpack.c.l.s4 1983009808
        %v190 = vunpack.c.0.s8 %v189
        %v191 = vperm.slane %v183, %v190
        %v192 = vrot.slane %v174, 4
        %v193 = vsel %vm180, %v192, %v162
        %v194 = vrot.slane %v162, 4
        %v195 = vsel %vm180, %v174, %v194
        %v197 = vunpack.c.l.s4 1983009808
        %v198 = vunpack.c.0.s8 %v197
        %v199 = vperm.slane %v193, %v198
        %v201 = vunpack.c.l.s4 1983009808
        %v202 = vunpack.c.0.s8 %v201
        %v203 = vperm.slane %v195, %v202
        %v204 = vrot.slane %v199, 4
        %v205 = vsel %vm180, %v204, %v187
        %v206 = vrot.slane %v187, 4
        %v207 = vsel %vm180, %v199, %v206
        %v209 = vunpack.c.l.s4 1934713408
        %v210 = vunpack.c.0.s8 %v209
        %v211 = vperm.slane %v205, %v210
        %v213 = vunpack.c.l.s4 1934713408
        %v214 = vunpack.c.0.s8 %v213
        %v215 = vperm.slane %v207, %v214
        %v216 = vrot.slane %v203, 4
        %v217 = vsel %vm180, %v216, %v191
        %v218 = vrot.slane %v191, 4
        %v219 = vsel %vm180, %v203, %v218
        %v221 = vunpack.c.l.s4 1934713408
        %v222 = vunpack.c.0.s8 %v221
        %v223 = vperm.slane %v217, %v222
        %v225 = vunpack.c.l.s4 1934713408
        %v226 = vunpack.c.0.s8 %v225
        %v227 = vperm.slane %v219, %v226
        %v228 = vrot.slane %v211, 4
        %v229 = vsel %vm180, 0.0, %v228
        %v230 = vrot.slane %v215, 4
        %v231 = vsel %vm180, 0.0, %v230
        %v232 = vrot.slane %v223, 4
        %v233 = vsel %vm180, 0.0, %v232
        %v234 = vrot.slane %v227, 4
        %v235 = vsel %vm180, 0.0, %v234
        %v236 = vrot.slane %v170, 4
        %v237 = vsel %vm180, %v236, %v158
        %v238 = vrot.slane %v158, 4
        %v239 = vsel %vm180, %v170, %v238
        %v241 = vunpack.c.l.s4 1983009808
        %v242 = vunpack.c.0.s8 %v241
        %v243 = vperm.slane %v237, %v242
        %v245 = vunpack.c.l.s4 1983009808
        %v246 = vunpack.c.0.s8 %v245
        %v247 = vperm.slane %v239, %v246
        %v248 = vrot.slane %v176, 4
        %v249 = vsel %vm180, %v248, %v164
        %v250 = vrot.slane %v164, 4
        %v251 = vsel %vm180, %v176, %v250
        %v253 = vunpack.c.l.s4 1983009808
        %v254 = vunpack.c.0.s8 %v253
        %v255 = vperm.slane %v249, %v254
        %v257 = vunpack.c.l.s4 1983009808
        %v258 = vunpack.c.0.s8 %v257
        %v259 = vperm.slane %v251, %v258
        %v260 = vrot.slane %v255, 4
        %v261 = vsel %vm180, %v260, %v243
        %v262 = vrot.slane %v243, 4
        %v263 = vsel %vm180, %v255, %v262
        %v265 = vunpack.c.l.s4 1934713408
        %v266 = vunpack.c.0.s8 %v265
        %v267 = vperm.slane %v261, %v266
        %v269 = vunpack.c.l.s4 1934713408
        %v270 = vunpack.c.0.s8 %v269
        %v271 = vperm.slane %v263, %v270
        %v272 = vrot.slane %v259, 4
        %v273 = vsel %vm180, %v272, %v247
        %v274 = vrot.slane %v247, 4
        %v275 = vsel %vm180, %v259, %v274
        %v277 = vunpack.c.l.s4 1934713408
        %v278 = vunpack.c.0.s8 %v277
        %v279 = vperm.slane %v273, %v278
        %v281 = vunpack.c.l.s4 1934713408
        %v282 = vunpack.c.0.s8 %v281
        %v283 = vperm.slane %v275, %v282
        %v284 = vrot.slane %v267, 4
        %v285 = vsel %vm180, 0.0, %v284
        %v286 = vrot.slane %v271, 4
        %v287 = vsel %vm180, 0.0, %v286
        %v288 = vrot.slane %v279, 4
        %v289 = vsel %vm180, 0.0, %v288
        %v290 = vrot.slane %v283, 4
        %v291 = vsel %vm180, 0.0, %v290
        %v292 = vsel %vm180, %v230, %v211
        %v294 = vunpack.c.l.s4 1983009808
        %v295 = vunpack.c.0.s8 %v294
        %v296 = vperm.slane %v292, %v295
        %v297 = vrot.slane %v231, 4
        %v298 = vsel %vm180, %v297, %v229
        %v300 = vunpack.c.l.s4 1983009808
        %v301 = vunpack.c.0.s8 %v300
        %v302 = vperm.slane %v298, %v301
        %v303 = vsel %vm180, %v234, %v223
        %v305 = vunpack.c.l.s4 1983009808
        %v306 = vunpack.c.0.s8 %v305
        %v307 = vperm.slane %v303, %v306
        %v308 = vrot.slane %v235, 4
        %v309 = vsel %vm180, %v308, %v233
        %v311 = vunpack.c.l.s4 1983009808
        %v312 = vunpack.c.0.s8 %v311
        %v313 = vperm.slane %v309, %v312
        %v314 = vrot.slane %v302, 4
        %v315 = vsel %vm180, %v314, %v296
        %v316 = vrot.slane %v296, 4
        %v317 = vsel %vm180, %v302, %v316
        %v319 = vunpack.c.l.s4 1934713408
        %v320 = vunpack.c.0.s8 %v319
        %v321 = vperm.slane %v315, %v320
        %v323 = vunpack.c.l.s4 1934713408
        %v324 = vunpack.c.0.s8 %v323
        %v325 = vperm.slane %v317, %v324
        %v326 = vrot.slane %v313, 4
        %v327 = vsel %vm180, %v326, %v307
        %v328 = vrot.slane %v307, 4
        %v329 = vsel %vm180, %v313, %v328
        %v331 = vunpack.c.l.s4 1934713408
        %v332 = vunpack.c.0.s8 %v331
        %v333 = vperm.slane %v327, %v332
        %v335 = vunpack.c.l.s4 1934713408
        %v336 = vunpack.c.0.s8 %v335
        %v337 = vperm.slane %v329, %v336
        %v338 = vrot.slane %v333, 4
        %v339 = vsel %vm180, %v338, %v321
        %v340 = vrot.slane %v321, 4
        %v341 = vsel %vm180, %v333, %v340
        %v342 = vrot.slane %v337, 4
        %v343 = vsel %vm180, %v342, %v325
        %v344 = vrot.slane %v325, 4
        %v345 = vsel %vm180, %v337, %v344
        %v346 = vsel %vm180, %v286, %v267
        %v348 = vunpack.c.l.s4 1983009808
        %v349 = vunpack.c.0.s8 %v348
        %v350 = vperm.slane %v346, %v349
        %v351 = vrot.slane %v287, 4
        %v352 = vsel %vm180, %v351, %v285
        %v354 = vunpack.c.l.s4 1983009808
        %v355 = vunpack.c.0.s8 %v354
        %v356 = vperm.slane %v352, %v355
        %v357 = vsel %vm180, %v290, %v279
        %v359 = vunpack.c.l.s4 1983009808
        %v360 = vunpack.c.0.s8 %v359
        %v361 = vperm.slane %v357, %v360
        %v362 = vrot.slane %v291, 4
        %v363 = vsel %vm180, %v362, %v289
        %v365 = vunpack.c.l.s4 1983009808
        %v366 = vunpack.c.0.s8 %v365
        %v367 = vperm.slane %v363, %v366
        %v368 = vrot.slane %v356, 4
        %v369 = vsel %vm180, %v368, %v350
        %v370 = vrot.slane %v350, 4
        %v371 = vsel %vm180, %v356, %v370
        %v373 = vunpack.c.l.s4 1934713408
        %v374 = vunpack.c.0.s8 %v373
        %v375 = vperm.slane %v369, %v374
        %v377 = vunpack.c.l.s4 1934713408
        %v378 = vunpack.c.0.s8 %v377
        %v379 = vperm.slane %v371, %v378
        %v380 = vrot.slane %v367, 4
        %v381 = vsel %vm180, %v380, %v361
        %v382 = vrot.slane %v361, 4
        %v383 = vsel %vm180, %v367, %v382
        %v385 = vunpack.c.l.s4 1934713408
        %v386 = vunpack.c.0.s8 %v385
        %v387 = vperm.slane %v381, %v386
        %v389 = vunpack.c.l.s4 1934713408
        %v390 = vunpack.c.0.s8 %v389
        %v391 = vperm.slane %v383, %v390
        %v392 = vrot.slane %v387, 4
        %v393 = vsel %vm180, %v392, %v375
        %v394 = vrot.slane %v375, 4
        %v395 = vsel %vm180, %v387, %v394
        %v396 = vrot.slane %v391, 4
        %v397 = vsel %vm180, %v396, %v379
        %v398 = vrot.slane %v379, 4
        %v399 = vsel %vm180, %v391, %v398
        %v400 = vrot.slane %v343, 4
        %v401 = vsel %vm180, %v400, %v339
        %v402 = vrot.slane %v339, 4
        %v403 = vsel %vm180, %v343, %v402
        %v405 = vunpack.c.l.s4 1983009808
        %v406 = vunpack.c.0.s8 %v405
        %v407 = vperm.slane %v401, %v406
        %v409 = vunpack.c.l.s4 1983009808
        %v410 = vunpack.c.0.s8 %v409
        %v411 = vperm.slane %v403, %v410
        %v412 = vrot.slane %v345, 4
        %v413 = vsel %vm180, %v412, %v341
        %v414 = vrot.slane %v341, 4
        %v415 = vsel %vm180, %v345, %v414
        %v417 = vunpack.c.l.s4 1983009808
        %v418 = vunpack.c.0.s8 %v417
        %v419 = vperm.slane %v413, %v418
        %v421 = vunpack.c.l.s4 1983009808
        %v422 = vunpack.c.0.s8 %v421
        %v423 = vperm.slane %v415, %v422
        %v424 = vrot.slane %v419, 4
        %v425 = vsel %vm180, %v424, %v407
        %v426 = vrot.slane %v407, 4
        %v427 = vsel %vm180, %v419, %v426
        %v429 = vunpack.c.l.s4 1934713408
        %v430 = vunpack.c.0.s8 %v429
        %v431 = vperm.slane %v425, %v430
        %v433 = vunpack.c.l.s4 1934713408
        %v434 = vunpack.c.0.s8 %v433
        %v435 = vperm.slane %v427, %v434
        %v436 = vrot.slane %v423, 4
        %v437 = vsel %vm180, %v436, %v411
        %v438 = vrot.slane %v411, 4
        %v439 = vsel %vm180, %v423, %v438
        %v441 = vunpack.c.l.s4 1934713408
        %v442 = vunpack.c.0.s8 %v441
        %v443 = vperm.slane %v437, %v442
        %v445 = vunpack.c.l.s4 1934713408
        %v446 = vunpack.c.0.s8 %v445
        %v447 = vperm.slane %v439, %v446
        %v448 = vrot.slane %v431, 4
        %v449 = vsel %vm180, 0.0, %v448
        %v450 = vrot.slane %v435, 4
        %v451 = vsel %vm180, 0.0, %v450
        %v452 = vrot.slane %v443, 4
        %v453 = vsel %vm180, 0.0, %v452
        %v454 = vrot.slane %v447, 4
        %v455 = vsel %vm180, 0.0, %v454
        %v456 = vrot.slane %v397, 4
        %v457 = vsel %vm180, %v456, %v393
        %v458 = vrot.slane %v393, 4
        %v459 = vsel %vm180, %v397, %v458
        %v461 = vunpack.c.l.s4 1983009808
        %v462 = vunpack.c.0.s8 %v461
        %v463 = vperm.slane %v457, %v462
        %v465 = vunpack.c.l.s4 1983009808
        %v466 = vunpack.c.0.s8 %v465
        %v467 = vperm.slane %v459, %v466
        %v468 = vrot.slane %v399, 4
        %v469 = vsel %vm180, %v468, %v395
        %v470 = vrot.slane %v395, 4
        %v471 = vsel %vm180, %v399, %v470
        %v473 = vunpack.c.l.s4 1983009808
        %v474 = vunpack.c.0.s8 %v473
        %v475 = vperm.slane %v469, %v474
        %v477 = vunpack.c.l.s4 1983009808
        %v478 = vunpack.c.0.s8 %v477
        %v479 = vperm.slane %v471, %v478
        %v480 = vrot.slane %v475, 4
        %v481 = vsel %vm180, %v480, %v463
        %v482 = vrot.slane %v463, 4
        %v483 = vsel %vm180, %v475, %v482
        %v485 = vunpack.c.l.s4 1934713408
        %v486 = vunpack.c.0.s8 %v485
        %v487 = vperm.slane %v481, %v486
        %v489 = vunpack.c.l.s4 1934713408
        %v490 = vunpack.c.0.s8 %v489
        %v491 = vperm.slane %v483, %v490
        %v492 = vrot.slane %v479, 4
        %v493 = vsel %vm180, %v492, %v467
        %v494 = vrot.slane %v467, 4
        %v495 = vsel %vm180, %v479, %v494
        %v497 = vunpack.c.l.s4 1934713408
        %v498 = vunpack.c.0.s8 %v497
        %v499 = vperm.slane %v493, %v498
        %v501 = vunpack.c.l.s4 1934713408
        %v502 = vunpack.c.0.s8 %v501
        %v503 = vperm.slane %v495, %v502
        %v504 = vrot.slane %v487, 4
        %v505 = vsel %vm180, 0.0, %v504
        %v506 = vrot.slane %v491, 4
        %v507 = vsel %vm180, 0.0, %v506
        %v508 = vrot.slane %v499, 4
        %v509 = vsel %vm180, 0.0, %v508
        %v510 = vrot.slane %v503, 4
        %v511 = vsel %vm180, 0.0, %v510
        %514 = vrot.lane.b32.xlu0 %v449, 8
        %v515 = vpop.permute.xlu0 %514
        %516 = vrot.lane.b32.xlu0 %v505, 8
        %v517 = vpop.permute.xlu0 %516
        %522 = vrot.lane.b32.xlu0 %v435, 16
        %v523 = vpop.permute.xlu0 %522
        %524 = vrot.lane.b32.xlu0 %v491, 16
        %v525 = vpop.permute.xlu0 %524
        %530 = vrot.lane.b32.xlu0 %v451, 24
        %v531 = vpop.permute.xlu0 %530
        %532 = vrot.lane.b32.xlu0 %v507, 24
        %v533 = vpop.permute.xlu0 %532
        %538 = vrot.lane.b32.xlu0 %v443, 32
        %v539 = vpop.permute.xlu0 %538
        %540 = vrot.lane.b32.xlu0 %v499, 32
        %v541 = vpop.permute.xlu0 %540
        %546 = vrot.lane.b32.xlu0 %v453, 40
        %v547 = vpop.permute.xlu0 %546
        %548 = vrot.lane.b32.xlu0 %v509, 40
        %v549 = vpop.permute.xlu0 %548
        %554 = vrot.lane.b32.xlu0 %v447, 48
        %v555 = vpop.permute.xlu0 %554
        %556 = vrot.lane.b32.xlu0 %v503, 48
        %v557 = vpop.permute.xlu0 %556
        %562 = vrot.lane.b32.xlu0 %v455, 56
        %v563 = vpop.permute.xlu0 %562
        %564 = vrot.lane.b32.xlu0 %v511, 56
        %v565 = vpop.permute.xlu0 %564
        %vm568 = vcmask 64512
        %v569 = vsel %vm568, %v431, %v515
        %v570 = vsel %vm568, %v487, %v517
        %vm571 = vcmask 130048
        %v572 = vsel %vm571, %v569, %v523
        %v573 = vsel %vm571, %v570, %v525
        %vm574 = vcmask 195584
        %v575 = vsel %vm574, %v572, %v531
        %v576 = vsel %vm574, %v573, %v533
        %vm577 = vcmask 261120
        %v578 = vsel %vm577, %v575, %v539
        %v579 = vsel %vm577, %v576, %v541
        %vm580 = vcmask 326656
        %v581 = vsel %vm580, %v578, %v547
        %v582 = vsel %vm580, %v579, %v549
        %vm583 = vcmask 392192
        %v584 = vsel %vm583, %v581, %v555
        %v585 = vsel %vm583, %v582, %v557
        %vm586 = vcmask 457728
        %v587 = vsel %vm586, %v584, %v563
        %v588 = vsel %vm586, %v585, %v565
        %s589 = scalar_lea.vmem %s135, 16 [#allocation2]
        %v590 = vld [vmem:[%s589] sm:$0xff]
        %v591 = vld [vmem:[%s589 + $0x8] sm:$0xff]
        %594 = vrot.lane.b32.xlu0 %v590, 120
        %v595 = vpop.permute.xlu0 %594
        %596 = vrot.lane.b32.xlu0 %v591, 120
        %v597 = vpop.permute.xlu0 %596
        %600 = vrot.lane.b32.xlu0 %v590, 112
        %v601 = vpop.permute.xlu0 %600
        %602 = vrot.lane.b32.xlu0 %v591, 112
        %v603 = vpop.permute.xlu0 %602
        %606 = vrot.lane.b32.xlu0 %v590, 104
        %v607 = vpop.permute.xlu0 %606
        %608 = vrot.lane.b32.xlu0 %v591, 104
        %v609 = vpop.permute.xlu0 %608
        %v612 = vrot.slane %v601, 4
        %v613 = vsel %vm180, %v612, %v590
        %v614 = vrot.slane %v590, 4
        %v615 = vsel %vm180, %v601, %v614
        %v617 = vunpack.c.l.s4 1983009808
        %v618 = vunpack.c.0.s8 %v617
        %v619 = vperm.slane %v613, %v618
        %v621 = vunpack.c.l.s4 1983009808
        %v622 = vunpack.c.0.s8 %v621
        %v623 = vperm.slane %v615, %v622
        %v624 = vrot.slane %v607, 4
        %v625 = vsel %vm180, %v624, %v595
        %v626 = vrot.slane %v595, 4
        %v627 = vsel %vm180, %v607, %v626
        %v629 = vunpack.c.l.s4 1983009808
        %v630 = vunpack.c.0.s8 %v629
        %v631 = vperm.slane %v625, %v630
        %v633 = vunpack.c.l.s4 1983009808
        %v634 = vunpack.c.0.s8 %v633
        %v635 = vperm.slane %v627, %v634
        %v636 = vrot.slane %v631, 4
        %v637 = vsel %vm180, %v636, %v619
        %v638 = vrot.slane %v619, 4
        %v639 = vsel %vm180, %v631, %v638
        %v641 = vunpack.c.l.s4 1934713408
        %v642 = vunpack.c.0.s8 %v641
        %v643 = vperm.slane %v637, %v642
        %v645 = vunpack.c.l.s4 1934713408
        %v646 = vunpack.c.0.s8 %v645
        %v647 = vperm.slane %v639, %v646
        %v648 = vrot.slane %v635, 4
        %v649 = vsel %vm180, %v648, %v623
        %v650 = vrot.slane %v623, 4
        %v651 = vsel %vm180, %v635, %v650
        %v653 = vunpack.c.l.s4 1934713408
        %v654 = vunpack.c.0.s8 %v653
        %v655 = vperm.slane %v649, %v654
        %v657 = vunpack.c.l.s4 1934713408
        %v658 = vunpack.c.0.s8 %v657
        %v659 = vperm.slane %v651, %v658
        %v660 = vrot.slane %v643, 4
        %v661 = vsel %vm180, 0.0, %v660
        %v662 = vrot.slane %v647, 4
        %v663 = vsel %vm180, 0.0, %v662
        %v664 = vrot.slane %v655, 4
        %v665 = vsel %vm180, 0.0, %v664
        %v666 = vrot.slane %v659, 4
        %v667 = vsel %vm180, 0.0, %v666
        %v668 = vrot.slane %v603, 4
        %v669 = vsel %vm180, %v668, %v591
        %v670 = vrot.slane %v591, 4
        %v671 = vsel %vm180, %v603, %v670
        %v673 = vunpack.c.l.s4 1983009808
        %v674 = vunpack.c.0.s8 %v673
        %v675 = vperm.slane %v669, %v674
        %v677 = vunpack.c.l.s4 1983009808
        %v678 = vunpack.c.0.s8 %v677
        %v679 = vperm.slane %v671, %v678
        %v680 = vrot.slane %v609, 4
        %v681 = vsel %vm180, %v680, %v597
        %v682 = vrot.slane %v597, 4
        %v683 = vsel %vm180, %v609, %v682
        %v685 = vunpack.c.l.s4 1983009808
        %v686 = vunpack.c.0.s8 %v685
        %v687 = vperm.slane %v681, %v686
        %v689 = vunpack.c.l.s4 1983009808
        %v690 = vunpack.c.0.s8 %v689
        %v691 = vperm.slane %v683, %v690
        %v692 = vrot.slane %v687, 4
        %v693 = vsel %vm180, %v692, %v675
        %v694 = vrot.slane %v675, 4
        %v695 = vsel %vm180, %v687, %v694
        %v697 = vunpack.c.l.s4 1934713408
        %v698 = vunpack.c.0.s8 %v697
        %v699 = vperm.slane %v693, %v698
        %v701 = vunpack.c.l.s4 1934713408
        %v702 = vunpack.c.0.s8 %v701
        %v703 = vperm.slane %v695, %v702
        %v704 = vrot.slane %v691, 4
        %v705 = vsel %vm180, %v704, %v679
        %v706 = vrot.slane %v679, 4
        %v707 = vsel %vm180, %v691, %v706
        %v709 = vunpack.c.l.s4 1934713408
        %v710 = vunpack.c.0.s8 %v709
        %v711 = vperm.slane %v705, %v710
        %v713 = vunpack.c.l.s4 1934713408
        %v714 = vunpack.c.0.s8 %v713
        %v715 = vperm.slane %v707, %v714
        %v716 = vrot.slane %v699, 4
        %v717 = vsel %vm180, 0.0, %v716
        %v718 = vrot.slane %v703, 4
        %v719 = vsel %vm180, 0.0, %v718
        %v720 = vrot.slane %v711, 4
        %v721 = vsel %vm180, 0.0, %v720
        %v722 = vrot.slane %v715, 4
        %v723 = vsel %vm180, 0.0, %v722
        %v724 = vsel %vm180, %v662, %v643
        %v726 = vunpack.c.l.s4 1983009808
        %v727 = vunpack.c.0.s8 %v726
        %v728 = vperm.slane %v724, %v727
        %v729 = vrot.slane %v663, 4
        %v730 = vsel %vm180, %v729, %v661
        %v732 = vunpack.c.l.s4 1983009808
        %v733 = vunpack.c.0.s8 %v732
        %v734 = vperm.slane %v730, %v733
        %v735 = vsel %vm180, %v666, %v655
        %v737 = vunpack.c.l.s4 1983009808
        %v738 = vunpack.c.0.s8 %v737
        %v739 = vperm.slane %v735, %v738
        %v740 = vrot.slane %v667, 4
        %v741 = vsel %vm180, %v740, %v665
        %v743 = vunpack.c.l.s4 1983009808
        %v744 = vunpack.c.0.s8 %v743
        %v745 = vperm.slane %v741, %v744
        %v746 = vrot.slane %v734, 4
        %v747 = vsel %vm180, %v746, %v728
        %v748 = vrot.slane %v728, 4
        %v749 = vsel %vm180, %v734, %v748
        %v751 = vunpack.c.l.s4 1934713408
        %v752 = vunpack.c.0.s8 %v751
        %v753 = vperm.slane %v747, %v752
        %v755 = vunpack.c.l.s4 1934713408
        %v756 = vunpack.c.0.s8 %v755
        %v757 = vperm.slane %v749, %v756
        %v758 = vrot.slane %v745, 4
        %v759 = vsel %vm180, %v758, %v739
        %v760 = vrot.slane %v739, 4
        %v761 = vsel %vm180, %v745, %v760
        %v763 = vunpack.c.l.s4 1934713408
        %v764 = vunpack.c.0.s8 %v763
        %v765 = vperm.slane %v759, %v764
        %v767 = vunpack.c.l.s4 1934713408
        %v768 = vunpack.c.0.s8 %v767
        %v769 = vperm.slane %v761, %v768
        %v770 = vrot.slane %v765, 4
        %v771 = vsel %vm180, %v770, %v753
        %v772 = vrot.slane %v753, 4
        %v773 = vsel %vm180, %v765, %v772
        %v774 = vrot.slane %v769, 4
        %v775 = vsel %vm180, %v774, %v757
        %v776 = vrot.slane %v757, 4
        %v777 = vsel %vm180, %v769, %v776
        %v778 = vsel %vm180, %v718, %v699
        %v780 = vunpack.c.l.s4 1983009808
        %v781 = vunpack.c.0.s8 %v780
        %v782 = vperm.slane %v778, %v781
        %v783 = vrot.slane %v719, 4
        %v784 = vsel %vm180, %v783, %v717
        %v786 = vunpack.c.l.s4 1983009808
        %v787 = vunpack.c.0.s8 %v786
        %v788 = vperm.slane %v784, %v787
        %v789 = vsel %vm180, %v722, %v711
        %v791 = vunpack.c.l.s4 1983009808
        %v792 = vunpack.c.0.s8 %v791
        %v793 = vperm.slane %v789, %v792
        %v794 = vrot.slane %v723, 4
        %v795 = vsel %vm180, %v794, %v721
        %v797 = vunpack.c.l.s4 1983009808
        %v798 = vunpack.c.0.s8 %v797
        %v799 = vperm.slane %v795, %v798
        %v800 = vrot.slane %v788, 4
        %v801 = vsel %vm180, %v800, %v782
        %v802 = vrot.slane %v782, 4
        %v803 = vsel %vm180, %v788, %v802
        %v805 = vunpack.c.l.s4 1934713408
        %v806 = vunpack.c.0.s8 %v805
        %v807 = vperm.slane %v801, %v806
        %v809 = vunpack.c.l.s4 1934713408
        %v810 = vunpack.c.0.s8 %v809
        %v811 = vperm.slane %v803, %v810
        %v812 = vrot.slane %v799, 4
        %v813 = vsel %vm180, %v812, %v793
        %v814 = vrot.slane %v793, 4
        %v815 = vsel %vm180, %v799, %v814
        %v817 = vunpack.c.l.s4 1934713408
        %v818 = vunpack.c.0.s8 %v817
        %v819 = vperm.slane %v813, %v818
        %v821 = vunpack.c.l.s4 1934713408
        %v822 = vunpack.c.0.s8 %v821
        %v823 = vperm.slane %v815, %v822
        %v824 = vrot.slane %v819, 4
        %v825 = vsel %vm180, %v824, %v807
        %v826 = vrot.slane %v807, 4
        %v827 = vsel %vm180, %v819, %v826
        %v828 = vrot.slane %v823, 4
        %v829 = vsel %vm180, %v828, %v811
        %v830 = vrot.slane %v811, 4
        %v831 = vsel %vm180, %v823, %v830
        %v832 = vrot.slane %v775, 4
        %v833 = vsel %vm180, %v832, %v771
        %v834 = vrot.slane %v771, 4
        %v835 = vsel %vm180, %v775, %v834
        %v837 = vunpack.c.l.s4 1983009808
        %v838 = vunpack.c.0.s8 %v837
        %v839 = vperm.slane %v833, %v838
        %v841 = vunpack.c.l.s4 1983009808
        %v842 = vunpack.c.0.s8 %v841
        %v843 = vperm.slane %v835, %v842
        %v844 = vrot.slane %v777, 4
        %v845 = vsel %vm180, %v844, %v773
        %v846 = vrot.slane %v773, 4
        %v847 = vsel %vm180, %v777, %v846
        %v849 = vunpack.c.l.s4 1983009808
        %v850 = vunpack.c.0.s8 %v849
        %v851 = vperm.slane %v845, %v850
        %v853 = vunpack.c.l.s4 1983009808
        %v854 = vunpack.c.0.s8 %v853
        %v855 = vperm.slane %v847, %v854
        %v856 = vrot.slane %v851, 4
        %v857 = vsel %vm180, %v856, %v839
        %v858 = vrot.slane %v839, 4
        %v859 = vsel %vm180, %v851, %v858
        %v861 = vunpack.c.l.s4 1934713408
        %v862 = vunpack.c.0.s8 %v861
        %v863 = vperm.slane %v857, %v862
        %v865 = vunpack.c.l.s4 1934713408
        %v866 = vunpack.c.0.s8 %v865
        %v867 = vperm.slane %v859, %v866
        %v868 = vrot.slane %v855, 4
        %v869 = vsel %vm180, %v868, %v843
        %v870 = vrot.slane %v843, 4
        %v871 = vsel %vm180, %v855, %v870
        %v873 = vunpack.c.l.s4 1934713408
        %v874 = vunpack.c.0.s8 %v873
        %v875 = vperm.slane %v869, %v874
        %v877 = vunpack.c.l.s4 1934713408
        %v878 = vunpack.c.0.s8 %v877
        %v879 = vperm.slane %v871, %v878
        %v880 = vrot.slane %v863, 4
        %v881 = vsel %vm180, 0.0, %v880
        %v882 = vrot.slane %v867, 4
        %v883 = vsel %vm180, 0.0, %v882
        %v884 = vrot.slane %v875, 4
        %v885 = vsel %vm180, 0.0, %v884
        %v886 = vrot.slane %v879, 4
        %v887 = vsel %vm180, 0.0, %v886
        %v888 = vrot.slane %v829, 4
        %v889 = vsel %vm180, %v888, %v825
        %v890 = vrot.slane %v825, 4
        %v891 = vsel %vm180, %v829, %v890
        %v893 = vunpack.c.l.s4 1983009808
        %v894 = vunpack.c.0.s8 %v893
        %v895 = vperm.slane %v889, %v894
        %v897 = vunpack.c.l.s4 1983009808
        %v898 = vunpack.c.0.s8 %v897
        %v899 = vperm.slane %v891, %v898
        %v900 = vrot.slane %v831, 4
        %v901 = vsel %vm180, %v900, %v827
        %v902 = vrot.slane %v827, 4
        %v903 = vsel %vm180, %v831, %v902
        %v905 = vunpack.c.l.s4 1983009808
        %v906 = vunpack.c.0.s8 %v905
        %v907 = vperm.slane %v901, %v906
        %v909 = vunpack.c.l.s4 1983009808
        %v910 = vunpack.c.0.s8 %v909
        %v911 = vperm.slane %v903, %v910
        %v912 = vrot.slane %v907, 4
        %v913 = vsel %vm180, %v912, %v895
        %v914 = vrot.slane %v895, 4
        %v915 = vsel %vm180, %v907, %v914
        %v917 = vunpack.c.l.s4 1934713408
        %v918 = vunpack.c.0.s8 %v917
        %v919 = vperm.slane %v913, %v918
        %v921 = vunpack.c.l.s4 1934713408
        %v922 = vunpack.c.0.s8 %v921
        %v923 = vperm.slane %v915, %v922
        %v924 = vrot.slane %v911, 4
        %v925 = vsel %vm180, %v924, %v899
        %v926 = vrot.slane %v899, 4
        %v927 = vsel %vm180, %v911, %v926
        %v929 = vunpack.c.l.s4 1934713408
        %v930 = vunpack.c.0.s8 %v929
        %v931 = vperm.slane %v925, %v930
        %v933 = vunpack.c.l.s4 1934713408
        %v934 = vunpack.c.0.s8 %v933
        %v935 = vperm.slane %v927, %v934
        %v936 = vrot.slane %v919, 4
        %v937 = vsel %vm180, 0.0, %v936
        %v938 = vrot.slane %v923, 4
        %v939 = vsel %vm180, 0.0, %v938
        %v940 = vrot.slane %v931, 4
        %v941 = vsel %vm180, 0.0, %v940
        %v942 = vrot.slane %v935, 4
        %v943 = vsel %vm180, 0.0, %v942
        %946 = vrot.lane.b32.xlu0 %v881, 8
        %v947 = vpop.permute.xlu0 %946
        %948 = vrot.lane.b32.xlu0 %v937, 8
        %v949 = vpop.permute.xlu0 %948
        %954 = vrot.lane.b32.xlu0 %v867, 16
        %v955 = vpop.permute.xlu0 %954
        %956 = vrot.lane.b32.xlu0 %v923, 16
        %v957 = vpop.permute.xlu0 %956
        %962 = vrot.lane.b32.xlu0 %v883, 24
        %v963 = vpop.permute.xlu0 %962
        %964 = vrot.lane.b32.xlu0 %v939, 24
        %v965 = vpop.permute.xlu0 %964
        %970 = vrot.lane.b32.xlu0 %v875, 32
        %v971 = vpop.permute.xlu0 %970
        %972 = vrot.lane.b32.xlu0 %v931, 32
        %v973 = vpop.permute.xlu0 %972
        %978 = vrot.lane.b32.xlu0 %v885, 40
        %v979 = vpop.permute.xlu0 %978
        %980 = vrot.lane.b32.xlu0 %v941, 40
        %v981 = vpop.permute.xlu0 %980
        %986 = vrot.lane.b32.xlu0 %v879, 48
        %v987 = vpop.permute.xlu0 %986
        %988 = vrot.lane.b32.xlu0 %v935, 48
        %v989 = vpop.permute.xlu0 %988
        %994 = vrot.lane.b32.xlu0 %v887, 56
        %v995 = vpop.permute.xlu0 %994
        %996 = vrot.lane.b32.xlu0 %v943, 56
        %v997 = vpop.permute.xlu0 %996
        %v1000 = vsel %vm568, %v863, %v947
        %v1001 = vsel %vm568, %v919, %v949
        %v1002 = vsel %vm571, %v1000, %v955
        %v1003 = vsel %vm571, %v1001, %v957
        %v1004 = vsel %vm574, %v1002, %v963
        %v1005 = vsel %vm574, %v1003, %v965
        %v1006 = vsel %vm577, %v1004, %v971
        %v1007 = vsel %vm577, %v1005, %v973
        %v1008 = vsel %vm580, %v1006, %v979
        %v1009 = vsel %vm580, %v1007, %v981
        %v1010 = vsel %vm583, %v1008, %v987
        %v1011 = vsel %vm583, %v1009, %v989
        %v1012 = vsel %vm586, %v1010, %v995
        %v1013 = vsel %vm586, %v1011, %v997
        %s1014 = scalar_lea.vmem %s135, 32 [#allocation2]
        %v1015 = vld [vmem:[%s1014] sm:$0xff]
        %v1016 = vld [vmem:[%s1014 + $0x8] sm:$0xff]
        %1019 = vrot.lane.b32.xlu0 %v1015, 120
        %v1020 = vpop.permute.xlu0 %1019
        %1021 = vrot.lane.b32.xlu0 %v1016, 120
        %v1022 = vpop.permute.xlu0 %1021
        %1025 = vrot.lane.b32.xlu0 %v1015, 112
        %v1026 = vpop.permute.xlu0 %1025
        %1027 = vrot.lane.b32.xlu0 %v1016, 112
        %v1028 = vpop.permute.xlu0 %1027
        %1031 = vrot.lane.b32.xlu0 %v1015, 104
        %v1032 = vpop.permute.xlu0 %1031
        %1033 = vrot.lane.b32.xlu0 %v1016, 104
        %v1034 = vpop.permute.xlu0 %1033
        %v1037 = vrot.slane %v1026, 4
        %v1038 = vsel %vm180, %v1037, %v1015
        %v1039 = vrot.slane %v1015, 4
        %v1040 = vsel %vm180, %v1026, %v1039
        %v1042 = vunpack.c.l.s4 1983009808
        %v1043 = vunpack.c.0.s8 %v1042
        %v1044 = vperm.slane %v1038, %v1043
        %v1046 = vunpack.c.l.s4 1983009808
        %v1047 = vunpack.c.0.s8 %v1046
        %v1048 = vperm.slane %v1040, %v1047
        %v1049 = vrot.slane %v1032, 4
        %v1050 = vsel %vm180, %v1049, %v1020
        %v1051 = vrot.slane %v1020, 4
        %v1052 = vsel %vm180, %v1032, %v1051
        %v1054 = vunpack.c.l.s4 1983009808
        %v1055 = vunpack.c.0.s8 %v1054
        %v1056 = vperm.slane %v1050, %v1055
        %v1058 = vunpack.c.l.s4 1983009808
        %v1059 = vunpack.c.0.s8 %v1058
        %v1060 = vperm.slane %v1052, %v1059
        %v1061 = vrot.slane %v1056, 4
        %v1062 = vsel %vm180, %v1061, %v1044
        %v1063 = vrot.slane %v1044, 4
        %v1064 = vsel %vm180, %v1056, %v1063
        %v1066 = vunpack.c.l.s4 1934713408
        %v1067 = vunpack.c.0.s8 %v1066
        %v1068 = vperm.slane %v1062, %v1067
        %v1070 = vunpack.c.l.s4 1934713408
        %v1071 = vunpack.c.0.s8 %v1070
        %v1072 = vperm.slane %v1064, %v1071
        %v1073 = vrot.slane %v1060, 4
        %v1074 = vsel %vm180, %v1073, %v1048
        %v1075 = vrot.slane %v1048, 4
        %v1076 = vsel %vm180, %v1060, %v1075
        %v1078 = vunpack.c.l.s4 1934713408
        %v1079 = vunpack.c.0.s8 %v1078
        %v1080 = vperm.slane %v1074, %v1079
        %v1082 = vunpack.c.l.s4 1934713408
        %v1083 = vunpack.c.0.s8 %v1082
        %v1084 = vperm.slane %v1076, %v1083
        %v1085 = vrot.slane %v1068, 4
        %v1086 = vsel %vm180, 0.0, %v1085
        %v1087 = vrot.slane %v1072, 4
        %v1088 = vsel %vm180, 0.0, %v1087
        %v1089 = vrot.slane %v1080, 4
        %v1090 = vsel %vm180, 0.0, %v1089
        %v1091 = vrot.slane %v1084, 4
        %v1092 = vsel %vm180, 0.0, %v1091
        %v1093 = vrot.slane %v1028, 4
        %v1094 = vsel %vm180, %v1093, %v1016
        %v1095 = vrot.slane %v1016, 4
        %v1096 = vsel %vm180, %v1028, %v1095
        %v1098 = vunpack.c.l.s4 1983009808
        %v1099 = vunpack.c.0.s8 %v1098
        %v1100 = vperm.slane %v1094, %v1099
        %v1102 = vunpack.c.l.s4 1983009808
        %v1103 = vunpack.c.0.s8 %v1102
        %v1104 = vperm.slane %v1096, %v1103
        %v1105 = vrot.slane %v1034, 4
        %v1106 = vsel %vm180, %v1105, %v1022
        %v1107 = vrot.slane %v1022, 4
        %v1108 = vsel %vm180, %v1034, %v1107
        %v1110 = vunpack.c.l.s4 1983009808
        %v1111 = vunpack.c.0.s8 %v1110
        %v1112 = vperm.slane %v1106, %v1111
        %v1114 = vunpack.c.l.s4 1983009808
        %v1115 = vunpack.c.0.s8 %v1114
        %v1116 = vperm.slane %v1108, %v1115
        %v1117 = vrot.slane %v1112, 4
        %v1118 = vsel %vm180, %v1117, %v1100
        %v1119 = vrot.slane %v1100, 4
        %v1120 = vsel %vm180, %v1112, %v1119
        %v1122 = vunpack.c.l.s4 1934713408
        %v1123 = vunpack.c.0.s8 %v1122
        %v1124 = vperm.slane %v1118, %v1123
        %v1126 = vunpack.c.l.s4 1934713408
        %v1127 = vunpack.c.0.s8 %v1126
        %v1128 = vperm.slane %v1120, %v1127
        %v1129 = vrot.slane %v1116, 4
        %v1130 = vsel %vm180, %v1129, %v1104
        %v1131 = vrot.slane %v1104, 4
        %v1132 = vsel %vm180, %v1116, %v1131
        %v1134 = vunpack.c.l.s4 1934713408
        %v1135 = vunpack.c.0.s8 %v1134
        %v1136 = vperm.slane %v1130, %v1135
        %v1138 = vunpack.c.l.s4 1934713408
        %v1139 = vunpack.c.0.s8 %v1138
        %v1140 = vperm.slane %v1132, %v1139
        %v1141 = vrot.slane %v1124, 4
        %v1142 = vsel %vm180, 0.0, %v1141
        %v1143 = vrot.slane %v1128, 4
        %v1144 = vsel %vm180, 0.0, %v1143
        %v1145 = vrot.slane %v1136, 4
        %v1146 = vsel %vm180, 0.0, %v1145
        %v1147 = vrot.slane %v1140, 4
        %v1148 = vsel %vm180, 0.0, %v1147
        %v1149 = vsel %vm180, %v1087, %v1068
        %v1151 = vunpack.c.l.s4 1983009808
        %v1152 = vunpack.c.0.s8 %v1151
        %v1153 = vperm.slane %v1149, %v1152
        %v1154 = vrot.slane %v1088, 4
        %v1155 = vsel %vm180, %v1154, %v1086
        %v1157 = vunpack.c.l.s4 1983009808
        %v1158 = vunpack.c.0.s8 %v1157
        %v1159 = vperm.slane %v1155, %v1158
        %v1160 = vsel %vm180, %v1091, %v1080
        %v1162 = vunpack.c.l.s4 1983009808
        %v1163 = vunpack.c.0.s8 %v1162
        %v1164 = vperm.slane %v1160, %v1163
        %v1165 = vrot.slane %v1092, 4
        %v1166 = vsel %vm180, %v1165, %v1090
        %v1168 = vunpack.c.l.s4 1983009808
        %v1169 = vunpack.c.0.s8 %v1168
        %v1170 = vperm.slane %v1166, %v1169
        %v1171 = vrot.slane %v1159, 4
        %v1172 = vsel %vm180, %v1171, %v1153
        %v1173 = vrot.slane %v1153, 4
        %v1174 = vsel %vm180, %v1159, %v1173
        %v1176 = vunpack.c.l.s4 1934713408
        %v1177 = vunpack.c.0.s8 %v1176
        %v1178 = vperm.slane %v1172, %v1177
        %v1180 = vunpack.c.l.s4 1934713408
        %v1181 = vunpack.c.0.s8 %v1180
        %v1182 = vperm.slane %v1174, %v1181
        %v1183 = vrot.slane %v1170, 4
        %v1184 = vsel %vm180, %v1183, %v1164
        %v1185 = vrot.slane %v1164, 4
        %v1186 = vsel %vm180, %v1170, %v1185
        %v1188 = vunpack.c.l.s4 1934713408
        %v1189 = vunpack.c.0.s8 %v1188
        %v1190 = vperm.slane %v1184, %v1189
        %v1192 = vunpack.c.l.s4 1934713408
        %v1193 = vunpack.c.0.s8 %v1192
        %v1194 = vperm.slane %v1186, %v1193
        %v1195 = vrot.slane %v1190, 4
        %v1196 = vsel %vm180, %v1195, %v1178
        %v1197 = vrot.slane %v1178, 4
        %v1198 = vsel %vm180, %v1190, %v1197
        %v1199 = vrot.slane %v1194, 4
        %v1200 = vsel %vm180, %v1199, %v1182
        %v1201 = vrot.slane %v1182, 4
        %v1202 = vsel %vm180, %v1194, %v1201
        %v1203 = vsel %vm180, %v1143, %v1124
        %v1205 = vunpack.c.l.s4 1983009808
        %v1206 = vunpack.c.0.s8 %v1205
        %v1207 = vperm.slane %v1203, %v1206
        %v1208 = vrot.slane %v1144, 4
        %v1209 = vsel %vm180, %v1208, %v1142
        %v1211 = vunpack.c.l.s4 1983009808
        %v1212 = vunpack.c.0.s8 %v1211
        %v1213 = vperm.slane %v1209, %v1212
        %v1214 = vsel %vm180, %v1147, %v1136
        %v1216 = vunpack.c.l.s4 1983009808
        %v1217 = vunpack.c.0.s8 %v1216
        %v1218 = vperm.slane %v1214, %v1217
        %v1219 = vrot.slane %v1148, 4
        %v1220 = vsel %vm180, %v1219, %v1146
        %v1222 = vunpack.c.l.s4 1983009808
        %v1223 = vunpack.c.0.s8 %v1222
        %v1224 = vperm.slane %v1220, %v1223
        %v1225 = vrot.slane %v1213, 4
        %v1226 = vsel %vm180, %v1225, %v1207
        %v1227 = vrot.slane %v1207, 4
        %v1228 = vsel %vm180, %v1213, %v1227
        %v1230 = vunpack.c.l.s4 1934713408
        %v1231 = vunpack.c.0.s8 %v1230
        %v1232 = vperm.slane %v1226, %v1231
        %v1234 = vunpack.c.l.s4 1934713408
        %v1235 = vunpack.c.0.s8 %v1234
        %v1236 = vperm.slane %v1228, %v1235
        %v1237 = vrot.slane %v1224, 4
        %v1238 = vsel %vm180, %v1237, %v1218
        %v1239 = vrot.slane %v1218, 4
        %v1240 = vsel %vm180, %v1224, %v1239
        %v1242 = vunpack.c.l.s4 1934713408
        %v1243 = vunpack.c.0.s8 %v1242
        %v1244 = vperm.slane %v1238, %v1243
        %v1246 = vunpack.c.l.s4 1934713408
        %v1247 = vunpack.c.0.s8 %v1246
        %v1248 = vperm.slane %v1240, %v1247
        %v1249 = vrot.slane %v1244, 4
        %v1250 = vsel %vm180, %v1249, %v1232
        %v1251 = vrot.slane %v1232, 4
        %v1252 = vsel %vm180, %v1244, %v1251
        %v1253 = vrot.slane %v1248, 4
        %v1254 = vsel %vm180, %v1253, %v1236
        %v1255 = vrot.slane %v1236, 4
        %v1256 = vsel %vm180, %v1248, %v1255
        %v1257 = vrot.slane %v1200, 4
        %v1258 = vsel %vm180, %v1257, %v1196
        %v1259 = vrot.slane %v1196, 4
        %v1260 = vsel %vm180, %v1200, %v1259
        %v1262 = vunpack.c.l.s4 1983009808
        %v1263 = vunpack.c.0.s8 %v1262
        %v1264 = vperm.slane %v1258, %v1263
        %v1266 = vunpack.c.l.s4 1983009808
        %v1267 = vunpack.c.0.s8 %v1266
        %v1268 = vperm.slane %v1260, %v1267
        %v1269 = vrot.slane %v1202, 4
        %v1270 = vsel %vm180, %v1269, %v1198
        %v1271 = vrot.slane %v1198, 4
        %v1272 = vsel %vm180, %v1202, %v1271
        %v1274 = vunpack.c.l.s4 1983009808
        %v1275 = vunpack.c.0.s8 %v1274
        %v1276 = vperm.slane %v1270, %v1275
        %v1278 = vunpack.c.l.s4 1983009808
        %v1279 = vunpack.c.0.s8 %v1278
        %v1280 = vperm.slane %v1272, %v1279
        %v1281 = vrot.slane %v1276, 4
        %v1282 = vsel %vm180, %v1281, %v1264
        %v1283 = vrot.slane %v1264, 4
        %v1284 = vsel %vm180, %v1276, %v1283
        %v1286 = vunpack.c.l.s4 1934713408
        %v1287 = vunpack.c.0.s8 %v1286
        %v1288 = vperm.slane %v1282, %v1287
        %v1290 = vunpack.c.l.s4 1934713408
        %v1291 = vunpack.c.0.s8 %v1290
        %v1292 = vperm.slane %v1284, %v1291
        %v1293 = vrot.slane %v1280, 4
        %v1294 = vsel %vm180, %v1293, %v1268
        %v1295 = vrot.slane %v1268, 4
        %v1296 = vsel %vm180, %v1280, %v1295
        %v1298 = vunpack.c.l.s4 1934713408
        %v1299 = vunpack.c.0.s8 %v1298
        %v1300 = vperm.slane %v1294, %v1299
        %v1302 = vunpack.c.l.s4 1934713408
        %v1303 = vunpack.c.0.s8 %v1302
        %v1304 = vperm.slane %v1296, %v1303
        %v1305 = vrot.slane %v1288, 4
        %v1306 = vsel %vm180, 0.0, %v1305
        %v1307 = vrot.slane %v1292, 4
        %v1308 = vsel %vm180, 0.0, %v1307
        %v1309 = vrot.slane %v1300, 4
        %v1310 = vsel %vm180, 0.0, %v1309
        %v1311 = vrot.slane %v1304, 4
        %v1312 = vsel %vm180, 0.0, %v1311
        %v1313 = vrot.slane %v1254, 4
        %v1314 = vsel %vm180, %v1313, %v1250
        %v1315 = vrot.slane %v1250, 4
        %v1316 = vsel %vm180, %v1254, %v1315
        %v1318 = vunpack.c.l.s4 1983009808
        %v1319 = vunpack.c.0.s8 %v1318
        %v1320 = vperm.slane %v1314, %v1319
        %v1322 = vunpack.c.l.s4 1983009808
        %v1323 = vunpack.c.0.s8 %v1322
        %v1324 = vperm.slane %v1316, %v1323
        %v1325 = vrot.slane %v1256, 4
        %v1326 = vsel %vm180, %v1325, %v1252
        %v1327 = vrot.slane %v1252, 4
        %v1328 = vsel %vm180, %v1256, %v1327
        %v1330 = vunpack.c.l.s4 1983009808
        %v1331 = vunpack.c.0.s8 %v1330
        %v1332 = vperm.slane %v1326, %v1331
        %v1334 = vunpack.c.l.s4 1983009808
        %v1335 = vunpack.c.0.s8 %v1334
        %v1336 = vperm.slane %v1328, %v1335
        %v1337 = vrot.slane %v1332, 4
        %v1338 = vsel %vm180, %v1337, %v1320
        %v1339 = vrot.slane %v1320, 4
        %v1340 = vsel %vm180, %v1332, %v1339
        %v1342 = vunpack.c.l.s4 1934713408
        %v1343 = vunpack.c.0.s8 %v1342
        %v1344 = vperm.slane %v1338, %v1343
        %v1346 = vunpack.c.l.s4 1934713408
        %v1347 = vunpack.c.0.s8 %v1346
        %v1348 = vperm.slane %v1340, %v1347
        %v1349 = vrot.slane %v1336, 4
        %v1350 = vsel %vm180, %v1349, %v1324
        %v1351 = vrot.slane %v1324, 4
        %v1352 = vsel %vm180, %v1336, %v1351
        %v1354 = vunpack.c.l.s4 1934713408
        %v1355 = vunpack.c.0.s8 %v1354
        %v1356 = vperm.slane %v1350, %v1355
        %v1358 = vunpack.c.l.s4 1934713408
        %v1359 = vunpack.c.0.s8 %v1358
        %v1360 = vperm.slane %v1352, %v1359
        %v1361 = vrot.slane %v1344, 4
        %v1362 = vsel %vm180, 0.0, %v1361
        %v1363 = vrot.slane %v1348, 4
        %v1364 = vsel %vm180, 0.0, %v1363
        %v1365 = vrot.slane %v1356, 4
        %v1366 = vsel %vm180, 0.0, %v1365
        %v1367 = vrot.slane %v1360, 4
        %v1368 = vsel %vm180, 0.0, %v1367
        %1371 = vrot.lane.b32.xlu0 %v1306, 8
        %v1372 = vpop.permute.xlu0 %1371
        %1373 = vrot.lane.b32.xlu0 %v1362, 8
        %v1374 = vpop.permute.xlu0 %1373
        %1379 = vrot.lane.b32.xlu0 %v1292, 16
        %v1380 = vpop.permute.xlu0 %1379
        %1381 = vrot.lane.b32.xlu0 %v1348, 16
        %v1382 = vpop.permute.xlu0 %1381
        %1387 = vrot.lane.b32.xlu0 %v1308, 24
        %v1388 = vpop.permute.xlu0 %1387
        %1389 = vrot.lane.b32.xlu0 %v1364, 24
        %v1390 = vpop.permute.xlu0 %1389
        %1395 = vrot.lane.b32.xlu0 %v1300, 32
        %v1396 = vpop.permute.xlu0 %1395
        %1397 = vrot.lane.b32.xlu0 %v1356, 32
        %v1398 = vpop.permute.xlu0 %1397
        %1403 = vrot.lane.b32.xlu0 %v1310, 40
        %v1404 = vpop.permute.xlu0 %1403
        %1405 = vrot.lane.b32.xlu0 %v1366, 40
        %v1406 = vpop.permute.xlu0 %1405
        %1411 = vrot.lane.b32.xlu0 %v1304, 48
        %v1412 = vpop.permute.xlu0 %1411
        %1413 = vrot.lane.b32.xlu0 %v1360, 48
        %v1414 = vpop.permute.xlu0 %1413
        %1419 = vrot.lane.b32.xlu0 %v1312, 56
        %v1420 = vpop.permute.xlu0 %1419
        %1421 = vrot.lane.b32.xlu0 %v1368, 56
        %v1422 = vpop.permute.xlu0 %1421
        %v1425 = vsel %vm568, %v1288, %v1372
        %v1426 = vsel %vm568, %v1344, %v1374
        %v1427 = vsel %vm571, %v1425, %v1380
        %v1428 = vsel %vm571, %v1426, %v1382
        %v1429 = vsel %vm574, %v1427, %v1388
        %v1430 = vsel %vm574, %v1428, %v1390
        %v1431 = vsel %vm577, %v1429, %v1396
        %v1432 = vsel %vm577, %v1430, %v1398
        %v1433 = vsel %vm580, %v1431, %v1404
        %v1434 = vsel %vm580, %v1432, %v1406
        %v1435 = vsel %vm583, %v1433, %v1412
        %v1436 = vsel %vm583, %v1434, %v1414
        %v1437 = vsel %vm586, %v1435, %v1420
        %v1438 = vsel %vm586, %v1436, %v1422
        %s1439 = scalar_lea.vmem %s135, 48 [#allocation2]
        %v1440 = vld [vmem:[%s1439] sm:$0xff]
        %v1441 = vld [vmem:[%s1439 + $0x8] sm:$0xff]
        %1444 = vrot.lane.b32.xlu0 %v1440, 120
        %v1445 = vpop.permute.xlu0 %1444
        %1446 = vrot.lane.b32.xlu0 %v1441, 120
        %v1447 = vpop.permute.xlu0 %1446
        %1450 = vrot.lane.b32.xlu0 %v1440, 112
        %v1451 = vpop.permute.xlu0 %1450
        %1452 = vrot.lane.b32.xlu0 %v1441, 112
        %v1453 = vpop.permute.xlu0 %1452
        %1456 = vrot.lane.b32.xlu0 %v1440, 104
        %v1457 = vpop.permute.xlu0 %1456
        %1458 = vrot.lane.b32.xlu0 %v1441, 104
        %v1459 = vpop.permute.xlu0 %1458
        %v1462 = vrot.slane %v1451, 4
        %v1463 = vsel %vm180, %v1462, %v1440
        %v1464 = vrot.slane %v1440, 4
        %v1465 = vsel %vm180, %v1451, %v1464
        %v1467 = vunpack.c.l.s4 1983009808
        %v1468 = vunpack.c.0.s8 %v1467
        %v1469 = vperm.slane %v1463, %v1468
        %v1471 = vunpack.c.l.s4 1983009808
        %v1472 = vunpack.c.0.s8 %v1471
        %v1473 = vperm.slane %v1465, %v1472
        %v1474 = vrot.slane %v1457, 4
        %v1475 = vsel %vm180, %v1474, %v1445
        %v1476 = vrot.slane %v1445, 4
        %v1477 = vsel %vm180, %v1457, %v1476
        %v1479 = vunpack.c.l.s4 1983009808
        %v1480 = vunpack.c.0.s8 %v1479
        %v1481 = vperm.slane %v1475, %v1480
        %v1483 = vunpack.c.l.s4 1983009808
        %v1484 = vunpack.c.0.s8 %v1483
        %v1485 = vperm.slane %v1477, %v1484
        %v1486 = vrot.slane %v1481, 4
        %v1487 = vsel %vm180, %v1486, %v1469
        %v1488 = vrot.slane %v1469, 4
        %v1489 = vsel %vm180, %v1481, %v1488
        %v1491 = vunpack.c.l.s4 1934713408
        %v1492 = vunpack.c.0.s8 %v1491
        %v1493 = vperm.slane %v1487, %v1492
        %v1495 = vunpack.c.l.s4 1934713408
        %v1496 = vunpack.c.0.s8 %v1495
        %v1497 = vperm.slane %v1489, %v1496
        %v1498 = vrot.slane %v1485, 4
        %v1499 = vsel %vm180, %v1498, %v1473
        %v1500 = vrot.slane %v1473, 4
        %v1501 = vsel %vm180, %v1485, %v1500
        %v1503 = vunpack.c.l.s4 1934713408
        %v1504 = vunpack.c.0.s8 %v1503
        %v1505 = vperm.slane %v1499, %v1504
        %v1507 = vunpack.c.l.s4 1934713408
        %v1508 = vunpack.c.0.s8 %v1507
        %v1509 = vperm.slane %v1501, %v1508
        %v1510 = vrot.slane %v1493, 4
        %v1511 = vsel %vm180, 0.0, %v1510
        %v1512 = vrot.slane %v1497, 4
        %v1513 = vsel %vm180, 0.0, %v1512
        %v1514 = vrot.slane %v1505, 4
        %v1515 = vsel %vm180, 0.0, %v1514
        %v1516 = vrot.slane %v1509, 4
        %v1517 = vsel %vm180, 0.0, %v1516
        %v1518 = vrot.slane %v1453, 4
        %v1519 = vsel %vm180, %v1518, %v1441
        %v1520 = vrot.slane %v1441, 4
        %v1521 = vsel %vm180, %v1453, %v1520
        %v1523 = vunpack.c.l.s4 1983009808
        %v1524 = vunpack.c.0.s8 %v1523
        %v1525 = vperm.slane %v1519, %v1524
        %v1527 = vunpack.c.l.s4 1983009808
        %v1528 = vunpack.c.0.s8 %v1527
        %v1529 = vperm.slane %v1521, %v1528
        %v1530 = vrot.slane %v1459, 4
        %v1531 = vsel %vm180, %v1530, %v1447
        %v1532 = vrot.slane %v1447, 4
        %v1533 = vsel %vm180, %v1459, %v1532
        %v1535 = vunpack.c.l.s4 1983009808
        %v1536 = vunpack.c.0.s8 %v1535
        %v1537 = vperm.slane %v1531, %v1536
        %v1539 = vunpack.c.l.s4 1983009808
        %v1540 = vunpack.c.0.s8 %v1539
        %v1541 = vperm.slane %v1533, %v1540
        %v1542 = vrot.slane %v1537, 4
        %v1543 = vsel %vm180, %v1542, %v1525
        %v1544 = vrot.slane %v1525, 4
        %v1545 = vsel %vm180, %v1537, %v1544
        %v1547 = vunpack.c.l.s4 1934713408
        %v1548 = vunpack.c.0.s8 %v1547
        %v1549 = vperm.slane %v1543, %v1548
        %v1551 = vunpack.c.l.s4 1934713408
        %v1552 = vunpack.c.0.s8 %v1551
        %v1553 = vperm.slane %v1545, %v1552
        %v1554 = vrot.slane %v1541, 4
        %v1555 = vsel %vm180, %v1554, %v1529
        %v1556 = vrot.slane %v1529, 4
        %v1557 = vsel %vm180, %v1541, %v1556
        %v1559 = vunpack.c.l.s4 1934713408
        %v1560 = vunpack.c.0.s8 %v1559
        %v1561 = vperm.slane %v1555, %v1560
        %v1563 = vunpack.c.l.s4 1934713408
        %v1564 = vunpack.c.0.s8 %v1563
        %v1565 = vperm.slane %v1557, %v1564
        %v1566 = vrot.slane %v1549, 4
        %v1567 = vsel %vm180, 0.0, %v1566
        %v1568 = vrot.slane %v1553, 4
        %v1569 = vsel %vm180, 0.0, %v1568
        %v1570 = vrot.slane %v1561, 4
        %v1571 = vsel %vm180, 0.0, %v1570
        %v1572 = vrot.slane %v1565, 4
        %v1573 = vsel %vm180, 0.0, %v1572
        %v1574 = vsel %vm180, %v1512, %v1493
        %v1576 = vunpack.c.l.s4 1983009808
        %v1577 = vunpack.c.0.s8 %v1576
        %v1578 = vperm.slane %v1574, %v1577
        %v1579 = vrot.slane %v1513, 4
        %v1580 = vsel %vm180, %v1579, %v1511
        %v1582 = vunpack.c.l.s4 1983009808
        %v1583 = vunpack.c.0.s8 %v1582
        %v1584 = vperm.slane %v1580, %v1583
        %v1585 = vsel %vm180, %v1516, %v1505
        %v1587 = vunpack.c.l.s4 1983009808
        %v1588 = vunpack.c.0.s8 %v1587
        %v1589 = vperm.slane %v1585, %v1588
        %v1590 = vrot.slane %v1517, 4
        %v1591 = vsel %vm180, %v1590, %v1515
        %v1593 = vunpack.c.l.s4 1983009808
        %v1594 = vunpack.c.0.s8 %v1593
        %v1595 = vperm.slane %v1591, %v1594
        %v1596 = vrot.slane %v1584, 4
        %v1597 = vsel %vm180, %v1596, %v1578
        %v1598 = vrot.slane %v1578, 4
        %v1599 = vsel %vm180, %v1584, %v1598
        %v1601 = vunpack.c.l.s4 1934713408
        %v1602 = vunpack.c.0.s8 %v1601
        %v1603 = vperm.slane %v1597, %v1602
        %v1605 = vunpack.c.l.s4 1934713408
        %v1606 = vunpack.c.0.s8 %v1605
        %v1607 = vperm.slane %v1599, %v1606
        %v1608 = vrot.slane %v1595, 4
        %v1609 = vsel %vm180, %v1608, %v1589
        %v1610 = vrot.slane %v1589, 4
        %v1611 = vsel %vm180, %v1595, %v1610
        %v1613 = vunpack.c.l.s4 1934713408
        %v1614 = vunpack.c.0.s8 %v1613
        %v1615 = vperm.slane %v1609, %v1614
        %v1617 = vunpack.c.l.s4 1934713408
        %v1618 = vunpack.c.0.s8 %v1617
        %v1619 = vperm.slane %v1611, %v1618
        %v1620 = vrot.slane %v1615, 4
        %v1621 = vsel %vm180, %v1620, %v1603
        %v1622 = vrot.slane %v1603, 4
        %v1623 = vsel %vm180, %v1615, %v1622
        %v1624 = vrot.slane %v1619, 4
        %v1625 = vsel %vm180, %v1624, %v1607
        %v1626 = vrot.slane %v1607, 4
        %v1627 = vsel %vm180, %v1619, %v1626
        %v1628 = vsel %vm180, %v1568, %v1549
        %v1630 = vunpack.c.l.s4 1983009808
        %v1631 = vunpack.c.0.s8 %v1630
        %v1632 = vperm.slane %v1628, %v1631
        %v1633 = vrot.slane %v1569, 4
        %v1634 = vsel %vm180, %v1633, %v1567
        %v1636 = vunpack.c.l.s4 1983009808
        %v1637 = vunpack.c.0.s8 %v1636
        %v1638 = vperm.slane %v1634, %v1637
        %v1639 = vsel %vm180, %v1572, %v1561
        %v1641 = vunpack.c.l.s4 1983009808
        %v1642 = vunpack.c.0.s8 %v1641
        %v1643 = vperm.slane %v1639, %v1642
        %v1644 = vrot.slane %v1573, 4
        %v1645 = vsel %vm180, %v1644, %v1571
        %v1647 = vunpack.c.l.s4 1983009808
        %v1648 = vunpack.c.0.s8 %v1647
        %v1649 = vperm.slane %v1645, %v1648
        %v1650 = vrot.slane %v1638, 4
        %v1651 = vsel %vm180, %v1650, %v1632
        %v1652 = vrot.slane %v1632, 4
        %v1653 = vsel %vm180, %v1638, %v1652
        %v1655 = vunpack.c.l.s4 1934713408
        %v1656 = vunpack.c.0.s8 %v1655
        %v1657 = vperm.slane %v1651, %v1656
        %v1659 = vunpack.c.l.s4 1934713408
        %v1660 = vunpack.c.0.s8 %v1659
        %v1661 = vperm.slane %v1653, %v1660
        %v1662 = vrot.slane %v1649, 4
        %v1663 = vsel %vm180, %v1662, %v1643
        %v1664 = vrot.slane %v1643, 4
        %v1665 = vsel %vm180, %v1649, %v1664
        %v1667 = vunpack.c.l.s4 1934713408
        %v1668 = vunpack.c.0.s8 %v1667
        %v1669 = vperm.slane %v1663, %v1668
        %v1671 = vunpack.c.l.s4 1934713408
        %v1672 = vunpack.c.0.s8 %v1671
        %v1673 = vperm.slane %v1665, %v1672
        %v1674 = vrot.slane %v1669, 4
        %v1675 = vsel %vm180, %v1674, %v1657
        %v1676 = vrot.slane %v1657, 4
        %v1677 = vsel %vm180, %v1669, %v1676
        %v1678 = vrot.slane %v1673, 4
        %v1679 = vsel %vm180, %v1678, %v1661
        %v1680 = vrot.slane %v1661, 4
        %v1681 = vsel %vm180, %v1673, %v1680
        %v1682 = vrot.slane %v1625, 4
        %v1683 = vsel %vm180, %v1682, %v1621
        %v1684 = vrot.slane %v1621, 4
        %v1685 = vsel %vm180, %v1625, %v1684
        %v1687 = vunpack.c.l.s4 1983009808
        %v1688 = vunpack.c.0.s8 %v1687
        %v1689 = vperm.slane %v1683, %v1688
        %v1691 = vunpack.c.l.s4 1983009808
        %v1692 = vunpack.c.0.s8 %v1691
        %v1693 = vperm.slane %v1685, %v1692
        %v1694 = vrot.slane %v1627, 4
        %v1695 = vsel %vm180, %v1694, %v1623
        %v1696 = vrot.slane %v1623, 4
        %v1697 = vsel %vm180, %v1627, %v1696
        %v1699 = vunpack.c.l.s4 1983009808
        %v1700 = vunpack.c.0.s8 %v1699
        %v1701 = vperm.slane %v1695, %v1700
        %v1703 = vunpack.c.l.s4 1983009808
        %v1704 = vunpack.c.0.s8 %v1703
        %v1705 = vperm.slane %v1697, %v1704
        %v1706 = vrot.slane %v1701, 4
        %v1707 = vsel %vm180, %v1706, %v1689
        %v1708 = vrot.slane %v1689, 4
        %v1709 = vsel %vm180, %v1701, %v1708
        %v1711 = vunpack.c.l.s4 1934713408
        %v1712 = vunpack.c.0.s8 %v1711
        %v1713 = vperm.slane %v1707, %v1712
        %v1715 = vunpack.c.l.s4 1934713408
        %v1716 = vunpack.c.0.s8 %v1715
        %v1717 = vperm.slane %v1709, %v1716
        %v1718 = vrot.slane %v1705, 4
        %v1719 = vsel %vm180, %v1718, %v1693
        %v1720 = vrot.slane %v1693, 4
        %v1721 = vsel %vm180, %v1705, %v1720
        %v1723 = vunpack.c.l.s4 1934713408
        %v1724 = vunpack.c.0.s8 %v1723
        %v1725 = vperm.slane %v1719, %v1724
        %v1727 = vunpack.c.l.s4 1934713408
        %v1728 = vunpack.c.0.s8 %v1727
        %v1729 = vperm.slane %v1721, %v1728
        %v1730 = vrot.slane %v1713, 4
        %v1731 = vsel %vm180, 0.0, %v1730
        %v1732 = vrot.slane %v1717, 4
        %v1733 = vsel %vm180, 0.0, %v1732
        %v1734 = vrot.slane %v1725, 4
        %v1735 = vsel %vm180, 0.0, %v1734
        %v1736 = vrot.slane %v1729, 4
        %v1737 = vsel %vm180, 0.0, %v1736
        %v1738 = vrot.slane %v1679, 4
        %v1739 = vsel %vm180, %v1738, %v1675
        %v1740 = vrot.slane %v1675, 4
        %v1741 = vsel %vm180, %v1679, %v1740
        %v1743 = vunpack.c.l.s4 1983009808
        %v1744 = vunpack.c.0.s8 %v1743
        %v1745 = vperm.slane %v1739, %v1744
        %v1747 = vunpack.c.l.s4 1983009808
        %v1748 = vunpack.c.0.s8 %v1747
        %v1749 = vperm.slane %v1741, %v1748
        %v1750 = vrot.slane %v1681, 4
        %v1751 = vsel %vm180, %v1750, %v1677
        %v1752 = vrot.slane %v1677, 4
        %v1753 = vsel %vm180, %v1681, %v1752
        %v1755 = vunpack.c.l.s4 1983009808
        %v1756 = vunpack.c.0.s8 %v1755
        %v1757 = vperm.slane %v1751, %v1756
        %v1759 = vunpack.c.l.s4 1983009808
        %v1760 = vunpack.c.0.s8 %v1759
        %v1761 = vperm.slane %v1753, %v1760
        %v1762 = vrot.slane %v1757, 4
        %v1763 = vsel %vm180, %v1762, %v1745
        %v1764 = vrot.slane %v1745, 4
        %v1765 = vsel %vm180, %v1757, %v1764
        %v1767 = vunpack.c.l.s4 1934713408
        %v1768 = vunpack.c.0.s8 %v1767
        %v1769 = vperm.slane %v1763, %v1768
        %v1771 = vunpack.c.l.s4 1934713408
        %v1772 = vunpack.c.0.s8 %v1771
        %v1773 = vperm.slane %v1765, %v1772
        %v1774 = vrot.slane %v1761, 4
        %v1775 = vsel %vm180, %v1774, %v1749
        %v1776 = vrot.slane %v1749, 4
        %v1777 = vsel %vm180, %v1761, %v1776
        %v1779 = vunpack.c.l.s4 1934713408
        %v1780 = vunpack.c.0.s8 %v1779
        %v1781 = vperm.slane %v1775, %v1780
        %v1783 = vunpack.c.l.s4 1934713408
        %v1784 = vunpack.c.0.s8 %v1783
        %v1785 = vperm.slane %v1777, %v1784
        %v1786 = vrot.slane %v1769, 4
        %v1787 = vsel %vm180, 0.0, %v1786
        %v1788 = vrot.slane %v1773, 4
        %v1789 = vsel %vm180, 0.0, %v1788
        %v1790 = vrot.slane %v1781, 4
        %v1791 = vsel %vm180, 0.0, %v1790
        %v1792 = vrot.slane %v1785, 4
        %v1793 = vsel %vm180, 0.0, %v1792
        %1796 = vrot.lane.b32.xlu0 %v1731, 8
        %v1797 = vpop.permute.xlu0 %1796
        %1798 = vrot.lane.b32.xlu0 %v1787, 8
        %v1799 = vpop.permute.xlu0 %1798
        %1804 = vrot.lane.b32.xlu0 %v1717, 16
        %v1805 = vpop.permute.xlu0 %1804
        %1806 = vrot.lane.b32.xlu0 %v1773, 16
        %v1807 = vpop.permute.xlu0 %1806
        %1812 = vrot.lane.b32.xlu0 %v1733, 24
        %v1813 = vpop.permute.xlu0 %1812
        %1814 = vrot.lane.b32.xlu0 %v1789, 24
        %v1815 = vpop.permute.xlu0 %1814
        %1820 = vrot.lane.b32.xlu0 %v1725, 32
        %v1821 = vpop.permute.xlu0 %1820
        %1822 = vrot.lane.b32.xlu0 %v1781, 32
        %v1823 = vpop.permute.xlu0 %1822
        %1828 = vrot.lane.b32.xlu0 %v1735, 40
        %v1829 = vpop.permute.xlu0 %1828
        %1830 = vrot.lane.b32.xlu0 %v1791, 40
        %v1831 = vpop.permute.xlu0 %1830
        %1836 = vrot.lane.b32.xlu0 %v1729, 48
        %v1837 = vpop.permute.xlu0 %1836
        %1838 = vrot.lane.b32.xlu0 %v1785, 48
        %v1839 = vpop.permute.xlu0 %1838
        %1844 = vrot.lane.b32.xlu0 %v1737, 56
        %v1845 = vpop.permute.xlu0 %1844
        %1846 = vrot.lane.b32.xlu0 %v1793, 56
        %v1847 = vpop.permute.xlu0 %1846
        %v1850 = vsel %vm568, %v1713, %v1797
        %v1851 = vsel %vm568, %v1769, %v1799
        %v1852 = vsel %vm571, %v1850, %v1805
        %v1853 = vsel %vm571, %v1851, %v1807
        %v1854 = vsel %vm574, %v1852, %v1813
        %v1855 = vsel %vm574, %v1853, %v1815
        %v1856 = vsel %vm577, %v1854, %v1821
        %v1857 = vsel %vm577, %v1855, %v1823
        %v1858 = vsel %vm580, %v1856, %v1829
        %v1859 = vsel %vm580, %v1857, %v1831
        %v1860 = vsel %vm583, %v1858, %v1837
        %v1861 = vsel %vm583, %v1859, %v1839
        %v1862 = vsel %vm586, %v1860, %v1845
        %v1863 = vsel %vm586, %v1861, %v1847
        %1866 = vrot.lane.b32.xlu0 %v1012, 64
        %v1867 = vpop.permute.xlu0 %1866
        %1868 = vrot.lane.b32.xlu0 %v1013, 64
        %v1869 = vpop.permute.xlu0 %1868
        %1874 = vrot.lane.b32.xlu0 %v1862, 64
        %v1875 = vpop.permute.xlu0 %1874
        %1876 = vrot.lane.b32.xlu0 %v1863, 64
        %v1877 = vpop.permute.xlu0 %1876
        %vm1880 = vcmask 523264
        %v1881 = vsel %vm1880, %v587, %v1867
        %v1882 = vsel %vm1880, %v588, %v1869
        %v1883 = vsel %vm1880, %v1437, %v1875
        %v1884 = vsel %vm1880, %v1438, %v1877
        %v1889 = vrot.slane %v1883, 4
        %v1890 = vrot.slane %v1884, 4
        %vm1891 = vcmask 1043456
        %v1892 = vsel %vm1891, %v1881, %v1889
        %v1893 = vsel %vm1891, %v1882, %v1890
        %1896 = vst [vmem:[%s154] sm:$0xff] %v1892
        %1897 = vst [vmem:[%s154 + $0x8] sm:$0xff] %v1893
        %s1898 = sand.u32 %s68, 1
        %s1899 = scalar_lea.sflag [#allocation4], %s1898
        %s1900 = sand.u32 %s68, 1
        %s1901 = smul.addr %s1900, 16
        %s1902 = scalar_lea.vmem [#allocation5], %s1901
        // Predicated region
        $region29: #{tpu_custom_call.1} parent=23 // pred_check
          %p1903 = pneg %p78
        $region30: #{tpu_custom_call.1} parent=23 // pred_check_branch
          %1905 = sbr.rel (%p1903) target = $region32
        $region31: #{tpu_custom_call.1} parent=23 // pred_region
          %s1906 = smul.u32 2, %s23
          %1908 = vsyncadd %s1899, 0
          %s1909 = smul.addr %s1906, 2
          %s1910 = smul.addr %s22, 4
          %s1911 = sadd.s32 %s1909, %s1910
          %s1912 = smul.addr %s1911, 4
          %s1913 = scalar_lea.hbm %s1, %s1912
          %s1914 = sshll.u32 %s1902, 4
          %s1915 = int_to_ptr.vmem [resolvable:$true] %s1914
          %s1916 = sshll.u32 %s1913, 4
          %s1917 = int_to_ptr.hbm [resolvable:$true] %s1916
          %1922 = dma.vmem_to_hbm [thread:$0]  %s1915, 256, %s1917, %s1899, 128, 128, 8
        $region32: #{tpu_custom_call.1} parent=23 // pred_fallthru
          _
      $region24: #{tpu_custom_call.1} parent=5 // pred_fallthru
        _
      %p1923 = scmp.le.s32.totalorder 2, %s13
      // Predicated region
      $region33: #{tpu_custom_call.1} parent=5 // pred_check
        %p1924 = pneg %p1923
      $region34: #{tpu_custom_call.1} parent=5 // pred_check_branch
        %1926 = sbr.rel (%p1924) target = $region36
      $region35: #{tpu_custom_call.1} parent=5 // pred_region
        %s1927 = ssub.s32 %s13, 2
        // Predicated region
        $region37: #{tpu_custom_call.1} parent=35 // pred_check
          %p1928 = pneg %p84
        $region38: #{tpu_custom_call.1} parent=35 // pred_check_branch
          %1930 = sbr.rel (%p1928) target = $region40
        $region39: #{tpu_custom_call.1} parent=35 // pred_region
          %s1931 = sand.u32 %s69, 1
          %s1932 = scalar_lea.sflag [#allocation4], %s1931
          %s1933 = sand.u32 %s69, 1
          %s1934 = smul.addr %s1933, 16
          %s1935 = scalar_lea.vmem [#allocation5], %s1934
          %1937 = dma.done %s1932, 256
        $region40: #{tpu_custom_call.1} parent=35 // pred_fallthru
          _
      $region36: #{tpu_custom_call.1} parent=5 // pred_fallthru
        _
    $region6: #{tpu_custom_call.1} parent=1 // loop_footer
      %s17 = sadd.s32 1, %s13
    $region7: #{tpu_custom_call.1} parent=1 // loop_footer_branch
      %12 = sbr.rel target = $region3
    $region8: #{tpu_custom_call.1} parent=1 // loop_exit
      _
    %1938 = vsyncpa [#allocation3], 1
    %s1939 = scalar_lea.sflag [#allocation3], 1
    %1940 = vsyncpa %s1939, 1
    %1941 = vsyncpa [#allocation4], 1
    %s1942 = scalar_lea.sflag [#allocation4], 1
    %1943 = vsyncpa %s1942, 1

</llo_original>
